<compile_context>
chip_gen: v7x
topology: tpu7x:2x2x1
jax: 0.10.0
libtpu: 0.0.40
codegen_flags: <defaults>
</compile_context>

<pallas_src>
import functools

import jax
import jax.numpy as jnp
from jax import lax
from jax.experimental import pallas as pl
from jax.experimental.pallas import tpu as pltpu


# ----------------------------------------------------------------------------
# Fused kernel: depthwise 3x3 (stride s, pad 1) + BN + ReLU, then pointwise 1x1
# + BN + ReLU, for one (batch-block, row-block) grid step.
# ----------------------------------------------------------------------------
def _mobilev1_kernel(*refs, stride, cdt, mxu_bf16):
    f32 = jnp.float32
    rb = pl.program_id(1)
    n_rb = pl.num_programs(1)

    if stride == 1:
        (body_ref, top_ref, bot_ref, dww_ref, dwb_ref,
         pww_ref, pwb_ref, o_ref, pad_ref) = refs
    else:
        (body_ref, top_ref, dww_ref, dwb_ref,
         pww_ref, pwb_ref, o_ref, pad_e_ref, pad_o_ref) = refs

    n_blk, t_ho, w_o, c_out = o_ref.shape
    _, blk_h, w_in, c_in = body_ref.shape

    has_top = rb > 0

    # --- stage the zero-padded input rows of this block in VMEM scratch ------
    # One staging store per element (plus tiny border writes); all 9 depthwise
    # taps below are then plain offset slices -- no concat / shift copies.
    if stride == 1:
        zrow = jnp.zeros((n_blk, 1, w_in, c_in), cdt)
        zcol = jnp.zeros((n_blk, blk_h + 2, 1, c_in), cdt)
        pad_ref[:, 1:1 + blk_h, 1:1 + w_in, :] = body_ref[...].astype(cdt)
        pad_ref[:, 0:1, 1:1 + w_in, :] = jnp.where(
            has_top, top_ref[...].astype(cdt), zrow)
        has_bot = rb < n_rb - 1
        pad_ref[:, 1 + blk_h:2 + blk_h, 1:1 + w_in, :] = jnp.where(
            has_bot, bot_ref[...].astype(cdt), zrow)
        pad_ref[:, :, 0:1, :] = zcol                       # left conv border
        pad_ref[:, :, 1 + w_in:2 + w_in, :] = zcol         # right conv border
    else:
        # stride 2: deinterleave W once with native sublane-strided ref loads.
        zrow = jnp.zeros((n_blk, 1, w_o, c_in), cdt)
        zcol = jnp.zeros((n_blk, blk_h + 1, 1, c_in), cdt)
        pad_e_ref[:, 1:1 + blk_h, :, :] = (
            body_ref[:, :, pl.ds(0, w_o, 2), :].astype(cdt))
        pad_o_ref[:, 1:1 + blk_h, 1:1 + w_o, :] = (
            body_ref[:, :, pl.ds(1, w_o, 2), :].astype(cdt))
        pad_e_ref[:, 0:1, :, :] = jnp.where(
            has_top, top_ref[:, :, pl.ds(0, w_o, 2), :].astype(cdt), zrow)
        pad_o_ref[:, 0:1, 1:1 + w_o, :] = jnp.where(
            has_top, top_ref[:, :, pl.ds(1, w_o, 2), :].astype(cdt), zrow)
        pad_o_ref[:, :, 0:1, :] = zcol                     # left conv border
        # (no bottom halo / right border needed for stride 2)

    # --- depthwise 3x3 + folded BN + ReLU (VPU) -------------------------------
    dww = dww_ref[...].astype(cdt)                         # (3, 3, Cin), resident
    acc = None
    for kh in range(3):
        for kw in range(3):
            if stride == 1:
                tap = pad_ref[:, kh:kh + t_ho, kw:kw + w_o, :]
            else:
                if kw == 1:
                    rows = pad_e_ref[:, kh:kh + 2 * t_ho - 1, :, :]
                else:
                    w0 = 0 if kw == 0 else 1
                    rows = pad_o_ref[:, kh:kh + 2 * t_ho - 1, w0:w0 + w_o, :]
                tap = rows[:, ::2]                         # cheap major-axis pick
            term = tap * dww[kh, kw, :]
            acc = term if acc is None else acc + term
    dw = jnp.maximum(acc.astype(f32) + dwb_ref[0].astype(f32), 0.0)

    # --- pointwise 1x1 + folded BN + ReLU (MXU, f32 accumulation) -------------
    mdt = jnp.bfloat16 if mxu_bf16 else f32
    m = n_blk * t_ho * w_o
    pw = jnp.dot(dw.reshape(m, c_in).astype(mdt), pww_ref[...].astype(mdt),
                 preferred_element_type=f32)
    pw = jnp.maximum(pw + pwb_ref[0].astype(f32), 0.0)
    o_ref[...] = pw.reshape(n_blk, t_ho, w_o, c_out).astype(o_ref.dtype)


# ----------------------------------------------------------------------------
# Generation-aware VMEM budget + tile selection
# ----------------------------------------------------------------------------
def _vmem_budget():
    cap = 128 * 1024 * 1024
    try:
        info = pltpu.get_tpu_info()
        c = getattr(info, "vmem_capacity_bytes", None)
        if c:
            cap = int(c)
    except Exception:
        pass
    # v5e/v6e (128 MiB): ~56 MiB scoped limit; v7x (64 MiB): ~28 MiB.
    vmem_limit = int(min(cap * 0.45, 56 * 1024 * 1024))
    step_budget = int(vmem_limit * 0.75)
    return vmem_limit, step_budget


def _pick_tiles(N, Ho, Wo, stride, W, Cin, Cout, in_b, out_b, cdt_b, budget):
    def step_bytes(nb, t):
        blk_h = t * stride
        body = 2 * nb * blk_h * W * Cin * in_b             # double-buffered body
        halo = 4 * nb * W * Cin * in_b                     # halo rows (x2 bufs)
        outb = 2 * nb * t * Wo * Cout * out_b              # double-buffered out
        if stride == 1:
            pad = nb * (blk_h + 2) * (W + 2) * Cin * cdt_b
        else:
            pad = nb * (blk_h + 1) * (2 * Wo + 1) * Cin * cdt_b
        act = 3 * nb * t * Wo * Cin * 4                    # acc / dw / lhs temps
        mm = 2 * nb * t * Wo * Cout * 4                    # matmul result / relu
        return body + halo + outb + pad + act + mm

    t_ho = 1
    for t in range(1, Ho + 1):
        if Ho % t == 0 and step_bytes(1, t) <= budget:
            t_ho = t
    n_rb = Ho // t_ho
    n_blk = 1
    if t_ho == Ho:   # whole image per step -> block batch (raise MXU M / steps)
        cand = [nb for nb in range(1, N + 1)
                if N % nb == 0 and step_bytes(nb, t_ho) <= budget
                and nb * t_ho * Wo <= 4096]
        if cand:
            keep2 = [nb for nb in cand if (N // nb) * n_rb >= 2]
            n_blk = max(keep2) if keep2 else max(cand)
    return n_blk, t_ho


# ----------------------------------------------------------------------------
# NHWC entry point (preferred)
# ----------------------------------------------------------------------------
def mobilev1_block_nhwc(x, dw_w, dw_b, pw_w, pw_b, *, stride=1, row_block=None,
                        batch_block=None, mxu_bf16=True, dw_bf16=None):
    """Fused MobileV1 block. x: (N, H, W, Cin) -> (N, Ho, Wo, Cout)."""
    if stride not in (1, 2):
        # TODO(synk): MobileNetV1 only uses stride 1/2; generalize if needed.
        raise NotImplementedError("stride must be 1 or 2")
    N, H, W, Cin = x.shape
    Cout = pw_w.shape[1]

    # For stride 2 with odd spatial dims, appending one zero row/col is
    # numerically identical to the conv's own zero padding.
    if stride == 2 and (H % 2 or W % 2):
        x = jnp.pad(x, ((0, 0), (0, H % 2), (0, W % 2), (0, 0)))
        N, H, W, Cin = x.shape

    Ho = (H - 1) // stride + 1
    Wo = (W - 1) // stride + 1

    if dw_bf16 is None:                 # bf16 depthwise only for bf16 activations
        dw_bf16 = (x.dtype == jnp.bfloat16)
    cdt = jnp.bfloat16 if dw_bf16 else jnp.float32
    cdt_b = jnp.dtype(cdt).itemsize

    in_b = x.dtype.itemsize
    out_b = x.dtype.itemsize
    vmem_limit, budget = _vmem_budget()

    auto_n_blk, auto_t_ho = _pick_tiles(N, Ho, Wo, stride, W, Cin, Cout,
                                        in_b, out_b, cdt_b, budget)
    if row_block is not None and Ho % int(row_block) == 0:
        t_ho, n_blk = int(row_block), 1
    else:
        t_ho, n_blk = auto_t_ho, auto_n_blk
    if batch_block is not None and N % int(batch_block) == 0:
        n_blk = int(batch_block)

    n_rb = Ho // t_ho
    blk_h = t_ho * stride               # input rows per body block
    assert n_rb * blk_h == H and N % n_blk == 0

    # bf16 MXU operands (f32 accumulation) also halve pointwise-weight HBM bytes.
    pww = pw_w.astype(jnp.bfloat16) if mxu_bf16 else pw_w

    body_spec = pl.BlockSpec((n_blk, blk_h, W, Cin), lambda n, rb: (n, rb, 0, 0))
    top_spec = pl.BlockSpec(
        (n_blk, 1, W, Cin),
        lambda n, rb: (n, jnp.maximum(rb * blk_h - 1, 0), 0, 0))
    w_specs = [
        pl.BlockSpec((3, 3, Cin), lambda n, rb: (0, 0, 0)),   # VMEM-resident
        pl.BlockSpec((1, Cin), lambda n, rb: (0, 0)),
        pl.BlockSpec((Cin, Cout), lambda n, rb: (0, 0)),
        pl.BlockSpec((1, Cout), lambda n, rb: (0, 0)),
    ]
    out_spec = pl.BlockSpec((n_blk, t_ho, Wo, Cout), lambda n, rb: (n, rb, 0, 0))

    if stride == 1:
        bot_spec = pl.BlockSpec(
            (n_blk, 1, W, Cin),
            lambda n, rb: (n, jnp.minimum((rb + 1) * blk_h, H - 1), 0, 0))
        in_specs = [body_spec, top_spec, bot_spec] + w_specs
        scratch = [pltpu.VMEM((n_blk, blk_h + 2, W + 2, Cin), cdt)]
        inputs = (x, x, x, dw_w, dw_b, pww, pw_b)
    else:
        in_specs = [body_spec, top_spec] + w_specs
        scratch = [pltpu.VMEM((n_blk, blk_h + 1, Wo, Cin), cdt),
                   pltpu.VMEM((n_blk, blk_h + 1, Wo + 1, Cin), cdt)]
        inputs = (x, x, dw_w, dw_b, pww, pw_b)

    n_halo = 2 if stride == 1 else 1
    flops = 2 * N * Ho * Wo * Cin * (9 + Cout)
    bytes_accessed = (x.size * in_b
                      + n_halo * N * n_rb * W * Cin * in_b
                      + N * Ho * Wo * Cout * out_b
                      + dw_w.size * dw_w.dtype.itemsize
                      + dw_b.size * dw_b.dtype.itemsize
                      + pww.size * pww.dtype.itemsize
                      + pw_b.size * pw_b.dtype.itemsize)

    kernel = functools.partial(_mobilev1_kernel, stride=stride, cdt=cdt,
                               mxu_bf16=mxu_bf16)

    return pl.pallas_call(
        kernel,
        out_shape=jax.ShapeDtypeStruct((N, Ho, Wo, Cout), x.dtype),
        grid_spec=pltpu.PrefetchScalarGridSpec(
            num_scalar_prefetch=0,
            grid=(N // n_blk, n_rb),
            in_specs=in_specs,
            out_specs=out_spec,
            scratch_shapes=scratch,
        ),
        compiler_params=pltpu.CompilerParams(
            dimension_semantics=("parallel", "parallel"),
            vmem_limit_bytes=vmem_limit),
        cost_estimate=pl.CostEstimate(
            flops=int(flops), transcendentals=0,
            bytes_accessed=int(bytes_accessed)),
    )(*inputs)


def mobilev1_block_nchw(x_nchw, dw_w, dw_b, pw_w, pw_b, *, stride=1,
                        row_block=None, batch_block=None, mxu_bf16=True,
                        dw_bf16=None):
    """Drop-in PyTorch-layout wrapper (two extra HBM transpose passes; prefer
    the NHWC entry point when the surrounding model can stay NHWC)."""
    x = jnp.transpose(x_nchw, (0, 2, 3, 1))
    y = mobilev1_block_nhwc(x, dw_w, dw_b, pw_w, pw_b, stride=stride,
                            row_block=row_block, batch_block=batch_block,
                            mxu_bf16=mxu_bf16, dw_bf16=dw_bf16)
    return jnp.transpose(y, (0, 3, 1, 2))


# ----------------------------------------------------------------------------
# Deterministic parameter construction + BatchNorm folding (eval semantics)
# ----------------------------------------------------------------------------
def _fold_bn(w, gamma, beta, mean, var, eps=1e-5):
    scale = gamma / jnp.sqrt(var + eps)
    return w * scale, beta - mean * scale


def make_params(key, in_planes, out_planes):
    ks = jax.random.split(key, 10)
    # Depthwise conv: torch weight (Cin, 1, 3, 3) -> ours (3, 3, Cin)
    dw_raw = jax.random.normal(ks[0], (3, 3, in_planes), jnp.float32) * 0.1
    dw_gamma = 1.0 + 0.1 * jax.random.normal(ks[1], (in_planes,), jnp.float32)
    dw_beta = 0.1 * jax.random.normal(ks[2], (in_planes,), jnp.float32)
    dw_mean = 0.1 * jax.random.normal(ks[3], (in_planes,), jnp.float32)
    dw_var = jnp.abs(jax.random.normal(ks[4], (in_planes,), jnp.float32)) + 0.5
    dw_scale, dw_bias = _fold_bn(jnp.ones((in_planes,)), dw_gamma, dw_beta,
                                 dw_mean, dw_var)
    dw_w = dw_raw * dw_scale
    dw_b = dw_bias.reshape(1, in_planes)

    # Pointwise conv: torch weight (Cout, Cin, 1, 1) -> ours (Cin, Cout)
    pw_raw = jax.random.normal(ks[5], (in_planes, out_planes), jnp.float32) * 0.1
    pw_gamma = 1.0 + 0.1 * jax.random.normal(ks[6], (out_planes,), jnp.float32)
    pw_beta = 0.1 * jax.random.normal(ks[7], (out_planes,), jnp.float32)
    pw_mean = 0.1 * jax.random.normal(ks[8], (out_planes,), jnp.float32)
    pw_var = jnp.abs(jax.random.normal(ks[9], (out_planes,), jnp.float32)) + 0.5
    pw_scale, pw_bias = _fold_bn(jnp.ones((out_planes,)), pw_gamma, pw_beta,
                                 pw_mean, pw_var)
    pw_w = pw_raw * pw_scale[None, :]
    pw_b = pw_bias.reshape(1, out_planes)
    return dw_w, dw_b, pw_w, pw_b


# ----------------------------------------------------------------------------
# Pure-JAX reference (lax conv, NHWC) for correctness checking
# ----------------------------------------------------------------------------
def reference_nhwc(x, dw_w, dw_b, pw_w, pw_b, *, stride=1):
    Cin = x.shape[-1]
    Cout = pw_w.shape[1]
    y = lax.conv_general_dilated(
        x, dw_w.reshape(3, 3, 1, Cin), window_strides=(stride, stride),
        padding=((1, 1), (1, 1)),
        dimension_numbers=("NHWC", "HWIO", "NHWC"),
        feature_group_count=Cin, precision=lax.Precision.HIGHEST)
    y = jnp.maximum(y + dw_b.reshape(1, 1, 1, Cin), 0.0)
    z = lax.conv_general_dilated(
        y, pw_w.reshape(1, 1, Cin, Cout), window_strides=(1, 1),
        padding=((0, 0), (0, 0)),
        dimension_numbers=("NHWC", "HWIO", "NHWC"),
        precision=lax.Precision.HIGHEST)
    return jnp.maximum(z + pw_b.reshape(1, 1, 1, Cout), 0.0)


if __name__ == "__main__":
    key = jax.random.PRNGKey(0)
    k1, k2, k3, k4 = jax.random.split(key, 4)

    # --- test 1: stride 1, forced 2 row blocks (halo path), exact f32 ----------
    N, H, W, Cin, Cout = 2, 16, 16, 4, 8
    x = jax.random.normal(k1, (N, H, W, Cin), jnp.float32)
    params = make_params(k2, Cin, Cout)
    ref = reference_nhwc(x, *params, stride=1)
    out = jax.block_until_ready(
        mobilev1_block_nhwc(x, *params, stride=1, row_block=8, batch_block=1,
                            mxu_bf16=False))
    assert out.shape == (N, H, W, Cout), out.shape
    assert jnp.allclose(out, ref, atol=1e-4, rtol=1e-4), "stride-1 f32 mismatch"

    # --- test 2: defaults (auto tiles, bf16 MXU) --------------------------------
    out_bf = jax.block_until_ready(mobilev1_block_nhwc(x, *params, stride=1))
    assert jnp.allclose(out_bf, ref, atol=5e-2, rtol=5e-2), "stride-1 bf16 mismatch"

    # --- test 3: stride 2, even dims, forced 2 row blocks, exact f32 ------------
    N2, H2, W2, Cin2, Cout2 = 2, 16, 16, 8, 16
    x2 = jax.random.normal(k3, (N2, H2, W2, Cin2), jnp.float32)
    params2 = make_params(k4, Cin2, Cout2)
    ref2 = reference_nhwc(x2, *params2, stride=2)
    out2 = jax.block_until_ready(
        mobilev1_block_nhwc(x2, *params2, stride=2, row_block=4, batch_block=1,
                            mxu_bf16=False))
    assert out2.shape == ref2.shape, (out2.shape, ref2.shape)
    assert jnp.allclose(out2, ref2, atol=1e-4, rtol=1e-4), "stride-2 f32 mismatch"

    # --- test 4: stride 2, odd spatial dims (pad-to-even path), defaults --------
    x3 = x2[:, :15, :15, :]
    ref3 = reference_nhwc(x3, *params2, stride=2)
    out3 = jax.block_until_ready(mobilev1_block_nhwc(x3, *params2, stride=2))
    assert out3.shape == ref3.shape, (out3.shape, ref3.shape)
    assert jnp.allclose(out3, ref3, atol=5e-2, rtol=5e-2), "stride-2 odd mismatch"

    # --- test 5: bf16 activations end-to-end (bf16 depthwise + bf16 MXU) --------
    xb = x.astype(jnp.bfloat16)
    refb = reference_nhwc(xb.astype(jnp.float32), *params, stride=1)
    outb = jax.block_until_ready(
        mobilev1_block_nhwc(xb, *params, stride=1, row_block=8, batch_block=1))
    assert outb.dtype == jnp.bfloat16
    assert jnp.allclose(outb.astype(jnp.float32), refb, atol=1e-1, rtol=1e-1), \
        "bf16 activation mismatch"

    # --- test 6: NCHW drop-in wrapper parity (PyTorch layout) -------------------
    x_nchw = jnp.transpose(x, (0, 3, 1, 2))
    out_nchw = jax.block_until_ready(
        mobilev1_block_nchw(x_nchw, *params, stride=1, mxu_bf16=False))
    assert jnp.allclose(out_nchw, jnp.transpose(ref, (0, 3, 1, 2)),
                        atol=1e-4, rtol=1e-4), "NCHW wrapper mismatch"

    print("KERNEL_OK")
</pallas_src>

<mosaic_0001>
module attributes {stable_mosaic.version = 11 : i64} {
  func.func @_mobilev1_kernel(%arg0: i32, %arg1: i32, %arg2: memref<1x8x16x4xf32, #tpu.memory_space<vmem>>, %arg3: memref<1x1x16x4xf32, #tpu.memory_space<vmem>>, %arg4: memref<1x1x16x4xf32, #tpu.memory_space<vmem>>, %arg5: memref<3x3x4xf32, #tpu.memory_space<vmem>>, %arg6: memref<1x4xf32, #tpu.memory_space<vmem>>, %arg7: memref<4x8xf32, #tpu.memory_space<vmem>>, %arg8: memref<1x8xf32, #tpu.memory_space<vmem>>, %arg9: memref<1x8x16x8xf32, #tpu.memory_space<vmem>>, %arg10: memref<1x10x18x4xf32, #tpu.memory_space<vmem>>) attributes {dimension_semantics = [#tpu.dimension_semantics<parallel>, #tpu.dimension_semantics<parallel>], iteration_bounds = array<i64: 2, 2>, scalar_prefetch = 0 : i64, scratch_operands = 1 : i64, tpu.core_type = #tpu.core_type<tc>, window_params = [{transform_indices = @transform_0, window_bounds = array<i64: 1, 8, 16, 4>}, {transform_indices = @transform_1, window_bounds = array<i64: 1, 1, 16, 4>}, {transform_indices = @transform_2, window_bounds = array<i64: 1, 1, 16, 4>}, {pipeline_mode = #tpu.pipeline_mode<synchronous>, transform_indices = @transform_3, window_bounds = array<i64: 3, 3, 4>}, {pipeline_mode = #tpu.pipeline_mode<synchronous>, transform_indices = @transform_4, window_bounds = array<i64: 1, 4>}, {pipeline_mode = #tpu.pipeline_mode<synchronous>, transform_indices = @transform_5, window_bounds = array<i64: 4, 8>}, {pipeline_mode = #tpu.pipeline_mode<synchronous>, transform_indices = @transform_6, window_bounds = array<i64: 1, 8>}, {transform_indices = @transform_7, window_bounds = array<i64: 1, 8, 16, 8>}]} {
    %c0_i32 = arith.constant 0 : i32
    %0 = arith.cmpi sgt, %arg1, %c0_i32 : i32
    %cst = arith.constant 0.000000e+00 : f32
    %1 = vector.broadcast %cst : f32 to vector<1x1x16x4xf32>
    %cst_0 = arith.constant 0.000000e+00 : f32
    %2 = vector.broadcast %cst_0 : f32 to vector<1x10x1x4xf32>
    %c0 = arith.constant 0 : index
    %c0_1 = arith.constant 0 : index
    %c0_2 = arith.constant 0 : index
    %c0_3 = arith.constant 0 : index
    %3 = vector.load %arg2[%c0, %c0_1, %c0_2, %c0_3] : memref<1x8x16x4xf32, #tpu.memory_space<vmem>>, vector<1x8x16x4xf32>
    %c0_4 = arith.constant 0 : index
    %c1 = arith.constant 1 : index
    %c1_5 = arith.constant 1 : index
    %c0_6 = arith.constant 0 : index
    %4 = vector.load %arg10[%c0_4, %c1, %c1_5, %c0_6] : memref<1x10x18x4xf32, #tpu.memory_space<vmem>>, vector<1x8x16x4xf32>
    tpu.vector_store %arg10[%c0_4, %c1, %c1_5, %c0_6], %3 {strides = array<i32>} : memref<1x10x18x4xf32, #tpu.memory_space<vmem>>, vector<1x8x16x4xf32>,
    %c0_7 = arith.constant 0 : index
    %c0_8 = arith.constant 0 : index
    %c0_9 = arith.constant 0 : index
    %c0_10 = arith.constant 0 : index
    %5 = vector.load %arg3[%c0_7, %c0_8, %c0_9, %c0_10] : memref<1x1x16x4xf32, #tpu.memory_space<vmem>>, vector<1x1x16x4xf32>
    %6 = arith.select %0, %5, %1 : vector<1x1x16x4xf32>
    %c0_11 = arith.constant 0 : index
    %c0_12 = arith.constant 0 : index
    %c1_13 = arith.constant 1 : index
    %c0_14 = arith.constant 0 : index
    %7 = vector.load %arg10[%c0_11, %c0_12, %c1_13, %c0_14] : memref<1x10x18x4xf32, #tpu.memory_space<vmem>>, vector<1x1x16x4xf32>
    tpu.vector_store %arg10[%c0_11, %c0_12, %c1_13, %c0_14], %6 {strides = array<i32>} : memref<1x10x18x4xf32, #tpu.memory_space<vmem>>, vector<1x1x16x4xf32>,
    %c1_i32 = arith.constant 1 : i32
    %8 = arith.cmpi slt, %arg1, %c1_i32 : i32
    %c0_15 = arith.constant 0 : index
    %c0_16 = arith.constant 0 : index
    %c0_17 = arith.constant 0 : index
    %c0_18 = arith.constant 0 : index
    %9 = vector.load %arg4[%c0_15, %c0_16, %c0_17, %c0_18] : memref<1x1x16x4xf32, #tpu.memory_space<vmem>>, vector<1x1x16x4xf32>
    %10 = arith.select %8, %9, %1 : vector<1x1x16x4xf32>
    %c0_19 = arith.constant 0 : index
    %c9 = arith.constant 9 : index
    %c1_20 = arith.constant 1 : index
    %c0_21 = arith.constant 0 : index
    %11 = vector.load %arg10[%c0_19, %c9, %c1_20, %c0_21] : memref<1x10x18x4xf32, #tpu.memory_space<vmem>>, vector<1x1x16x4xf32>
    tpu.vector_store %arg10[%c0_19, %c9, %c1_20, %c0_21], %10 {strides = array<i32>} : memref<1x10x18x4xf32, #tpu.memory_space<vmem>>, vector<1x1x16x4xf32>,
    %c0_22 = arith.constant 0 : index
    %c0_23 = arith.constant 0 : index
    %c0_24 = arith.constant 0 : index
    %c0_25 = arith.constant 0 : index
    %12 = vector.load %arg10[%c0_22, %c0_23, %c0_24, %c0_25] : memref<1x10x18x4xf32, #tpu.memory_space<vmem>>, vector<1x10x1x4xf32>
    tpu.vector_store %arg10[%c0_22, %c0_23, %c0_24, %c0_25], %2 {strides = array<i32>} : memref<1x10x18x4xf32, #tpu.memory_space<vmem>>, vector<1x10x1x4xf32>,
    %c0_26 = arith.constant 0 : index
    %c0_27 = arith.constant 0 : index
    %c17 = arith.constant 17 : index
    %c0_28 = arith.constant 0 : index
    %13 = vector.load %arg10[%c0_26, %c0_27, %c17, %c0_28] : memref<1x10x18x4xf32, #tpu.memory_space<vmem>>, vector<1x10x1x4xf32>
    tpu.vector_store %arg10[%c0_26, %c0_27, %c17, %c0_28], %2 {strides = array<i32>} : memref<1x10x18x4xf32, #tpu.memory_space<vmem>>, vector<1x10x1x4xf32>,
    %c0_29 = arith.constant 0 : index
    %c0_30 = arith.constant 0 : index
    %c0_31 = arith.constant 0 : index
    %14 = vector.load %arg5[%c0_29, %c0_30, %c0_31] : memref<3x3x4xf32, #tpu.memory_space<vmem>>, vector<3x3x4xf32>
    %c0_32 = arith.constant 0 : index
    %c0_33 = arith.constant 0 : index
    %c0_34 = arith.constant 0 : index
    %c0_35 = arith.constant 0 : index
    %15 = vector.load %arg10[%c0_32, %c0_33, %c0_34, %c0_35] : memref<1x10x18x4xf32, #tpu.memory_space<vmem>>, vector<1x8x16x4xf32>
    %16 = vector.extract_strided_slice %14 {offsets = [0, 0, 0], sizes = [1, 1, 4], strides = [1, 1, 1]} : vector<3x3x4xf32> to vector<1x1x4xf32>
    %17 = vector.shape_cast %16 : vector<1x1x4xf32> to vector<4xf32>
    %18 = vector.shape_cast %17 : vector<4xf32> to vector<1x1x1x4xf32>
    %19 = vector.broadcast %18 : vector<1x1x1x4xf32> to vector<1x8x16x4xf32>
    %20 = arith.mulf %15, %19 : vector<1x8x16x4xf32>
    %c0_36 = arith.constant 0 : index
    %c0_37 = arith.constant 0 : index
    %c1_38 = arith.constant 1 : index
    %c0_39 = arith.constant 0 : index
    %21 = vector.load %arg10[%c0_36, %c0_37, %c1_38, %c0_39] : memref<1x10x18x4xf32, #tpu.memory_space<vmem>>, vector<1x8x16x4xf32>
    %22 = vector.extract_strided_slice %14 {offsets = [0, 1, 0], sizes = [1, 1, 4], strides = [1, 1, 1]} : vector<3x3x4xf32> to vector<1x1x4xf32>
    %23 = vector.shape_cast %22 : vector<1x1x4xf32> to vector<4xf32>
    %24 = vector.shape_cast %23 : vector<4xf32> to vector<1x1x1x4xf32>
    %25 = vector.broadcast %24 : vector<1x1x1x4xf32> to vector<1x8x16x4xf32>
    %26 = arith.mulf %21, %25 : vector<1x8x16x4xf32>
    %27 = arith.addf %20, %26 : vector<1x8x16x4xf32>
    %c0_40 = arith.constant 0 : index
    %c0_41 = arith.constant 0 : index
    %c2 = arith.constant 2 : index
    %c0_42 = arith.constant 0 : index
    %28 = vector.load %arg10[%c0_40, %c0_41, %c2, %c0_42] : memref<1x10x18x4xf32, #tpu.memory_space<vmem>>, vector<1x8x16x4xf32>
    %29 = vector.extract_strided_slice %14 {offsets = [0, 2, 0], sizes = [1, 1, 4], strides = [1, 1, 1]} : vector<3x3x4xf32> to vector<1x1x4xf32>
    %30 = vector.shape_cast %29 : vector<1x1x4xf32> to vector<4xf32>
    %31 = vector.shape_cast %30 : vector<4xf32> to vector<1x1x1x4xf32>
    %32 = vector.broadcast %31 : vector<1x1x1x4xf32> to vector<1x8x16x4xf32>
    %33 = arith.mulf %28, %32 : vector<1x8x16x4xf32>
    %34 = arith.addf %27, %33 : vector<1x8x16x4xf32>
    %c0_43 = arith.constant 0 : index
    %c1_44 = arith.constant 1 : index
    %c0_45 = arith.constant 0 : index
    %c0_46 = arith.constant 0 : index
    %35 = vector.load %arg10[%c0_43, %c1_44, %c0_45, %c0_46] : memref<1x10x18x4xf32, #tpu.memory_space<vmem>>, vector<1x8x16x4xf32>
    %36 = vector.extract_strided_slice %14 {offsets = [1, 0, 0], sizes = [1, 1, 4], strides = [1, 1, 1]} : vector<3x3x4xf32> to vector<1x1x4xf32>
    %37 = vector.shape_cast %36 : vector<1x1x4xf32> to vector<4xf32>
    %38 = vector.shape_cast %37 : vector<4xf32> to vector<1x1x1x4xf32>
    %39 = vector.broadcast %38 : vector<1x1x1x4xf32> to vector<1x8x16x4xf32>
    %40 = arith.mulf %35, %39 : vector<1x8x16x4xf32>
    %41 = arith.addf %34, %40 : vector<1x8x16x4xf32>
    %c0_47 = arith.constant 0 : index
    %c1_48 = arith.constant 1 : index
    %c1_49 = arith.constant 1 : index
    %c0_50 = arith.constant 0 : index
    %42 = vector.load %arg10[%c0_47, %c1_48, %c1_49, %c0_50] : memref<1x10x18x4xf32, #tpu.memory_space<vmem>>, vector<1x8x16x4xf32>
    %43 = vector.extract_strided_slice %14 {offsets = [1, 1, 0], sizes = [1, 1, 4], strides = [1, 1, 1]} : vector<3x3x4xf32> to vector<1x1x4xf32>
    %44 = vector.shape_cast %43 : vector<1x1x4xf32> to vector<4xf32>
    %45 = vector.shape_cast %44 : vector<4xf32> to vector<1x1x1x4xf32>
    %46 = vector.broadcast %45 : vector<1x1x1x4xf32> to vector<1x8x16x4xf32>
    %47 = arith.mulf %42, %46 : vector<1x8x16x4xf32>
    %48 = arith.addf %41, %47 : vector<1x8x16x4xf32>
    %c0_51 = arith.constant 0 : index
    %c1_52 = arith.constant 1 : index
    %c2_53 = arith.constant 2 : index
    %c0_54 = arith.constant 0 : index
    %49 = vector.load %arg10[%c0_51, %c1_52, %c2_53, %c0_54] : memref<1x10x18x4xf32, #tpu.memory_space<vmem>>, vector<1x8x16x4xf32>
    %50 = vector.extract_strided_slice %14 {offsets = [1, 2, 0], sizes = [1, 1, 4], strides = [1, 1, 1]} : vector<3x3x4xf32> to vector<1x1x4xf32>
    %51 = vector.shape_cast %50 : vector<1x1x4xf32> to vector<4xf32>
    %52 = vector.shape_cast %51 : vector<4xf32> to vector<1x1x1x4xf32>
    %53 = vector.broadcast %52 : vector<1x1x1x4xf32> to vector<1x8x16x4xf32>
    %54 = arith.mulf %49, %53 : vector<1x8x16x4xf32>
    %55 = arith.addf %48, %54 : vector<1x8x16x4xf32>
    %c0_55 = arith.constant 0 : index
    %c2_56 = arith.constant 2 : index
    %c0_57 = arith.constant 0 : index
    %c0_58 = arith.constant 0 : index
    %56 = vector.load %arg10[%c0_55, %c2_56, %c0_57, %c0_58] : memref<1x10x18x4xf32, #tpu.memory_space<vmem>>, vector<1x8x16x4xf32>
    %57 = vector.extract_strided_slice %14 {offsets = [2, 0, 0], sizes = [1, 1, 4], strides = [1, 1, 1]} : vector<3x3x4xf32> to vector<1x1x4xf32>
    %58 = vector.shape_cast %57 : vector<1x1x4xf32> to vector<4xf32>
    %59 = vector.shape_cast %58 : vector<4xf32> to vector<1x1x1x4xf32>
    %60 = vector.broadcast %59 : vector<1x1x1x4xf32> to vector<1x8x16x4xf32>
    %61 = arith.mulf %56, %60 : vector<1x8x16x4xf32>
    %62 = arith.addf %55, %61 : vector<1x8x16x4xf32>
    %c0_59 = arith.constant 0 : index
    %c2_60 = arith.constant 2 : index
    %c1_61 = arith.constant 1 : index
    %c0_62 = arith.constant 0 : index
    %63 = vector.load %arg10[%c0_59, %c2_60, %c1_61, %c0_62] : memref<1x10x18x4xf32, #tpu.memory_space<vmem>>, vector<1x8x16x4xf32>
    %64 = vector.extract_strided_slice %14 {offsets = [2, 1, 0], sizes = [1, 1, 4], strides = [1, 1, 1]} : vector<3x3x4xf32> to vector<1x1x4xf32>
    %65 = vector.shape_cast %64 : vector<1x1x4xf32> to vector<4xf32>
    %66 = vector.shape_cast %65 : vector<4xf32> to vector<1x1x1x4xf32>
    %67 = vector.broadcast %66 : vector<1x1x1x4xf32> to vector<1x8x16x4xf32>
    %68 = arith.mulf %63, %67 : vector<1x8x16x4xf32>
    %69 = arith.addf %62, %68 : vector<1x8x16x4xf32>
    %c0_63 = arith.constant 0 : index
    %c2_64 = arith.constant 2 : index
    %c2_65 = arith.constant 2 : index
    %c0_66 = arith.constant 0 : index
    %70 = vector.load %arg10[%c0_63, %c2_64, %c2_65, %c0_66] : memref<1x10x18x4xf32, #tpu.memory_space<vmem>>, vector<1x8x16x4xf32>
    %71 = vector.extract_strided_slice %14 {offsets = [2, 2, 0], sizes = [1, 1, 4], strides = [1, 1, 1]} : vector<3x3x4xf32> to vector<1x1x4xf32>
    %72 = vector.shape_cast %71 : vector<1x1x4xf32> to vector<4xf32>
    %73 = vector.shape_cast %72 : vector<4xf32> to vector<1x1x1x4xf32>
    %74 = vector.broadcast %73 : vector<1x1x1x4xf32> to vector<1x8x16x4xf32>
    %75 = arith.mulf %70, %74 : vector<1x8x16x4xf32>
    %76 = arith.addf %69, %75 : vector<1x8x16x4xf32>
    %c0_67 = arith.constant 0 : index
    %c0_68 = arith.constant 0 : index
    %77 = vector.load %arg6[%c0_67, %c0_68] : memref<1x4xf32, #tpu.memory_space<vmem>>, vector<1x4xf32>
    %78 = vector.shape_cast %77 : vector<1x4xf32> to vector<4xf32>
    %79 = vector.shape_cast %78 : vector<4xf32> to vector<1x1x1x4xf32>
    %80 = vector.broadcast %79 : vector<1x1x1x4xf32> to vector<1x8x16x4xf32>
    %81 = arith.addf %76, %80 : vector<1x8x16x4xf32>
    %cst_69 = arith.constant 0.000000e+00 : f32
    %82 = vector.broadcast %cst_69 : f32 to vector<1x8x16x4xf32>
    %83 = arith.maximumf %81, %82 : vector<1x8x16x4xf32>
    %84 = vector.shape_cast %83 : vector<1x8x16x4xf32> to vector<128x4xf32>
    %c0_70 = arith.constant 0 : index
    %c0_71 = arith.constant 0 : index
    %85 = vector.load %arg7[%c0_70, %c0_71] : memref<4x8xf32, #tpu.memory_space<vmem>>, vector<4x8xf32>
    %cst_72 = arith.constant dense<0.000000e+00> : vector<128x8xf32>
    %86 = tpu.matmul %84, %85, %cst_72 {dimension_numbers = #tpu.dot_dimension_numbers<[1], [0], [0], [1], [0, 0, 1, 1], [], []>} : vector<128x4xf32>, vector<4x8xf32>, vector<128x8xf32> -> vector<128x8xf32>
    %c0_73 = arith.constant 0 : index
    %c0_74 = arith.constant 0 : index
    %87 = vector.load %arg8[%c0_73, %c0_74] : memref<1x8xf32, #tpu.memory_space<vmem>>, vector<1x8xf32>
    %88 = vector.shape_cast %87 : vector<1x8xf32> to vector<8xf32>
    %89 = vector.shape_cast %88 : vector<8xf32> to vector<1x8xf32>
    %90 = vector.broadcast %89 : vector<1x8xf32> to vector<128x8xf32>
    %91 = arith.addf %86, %90 : vector<128x8xf32>
    %cst_75 = arith.constant 0.000000e+00 : f32
    %92 = vector.broadcast %cst_75 : f32 to vector<128x8xf32>
    %93 = arith.maximumf %91, %92 : vector<128x8xf32>
    %94 = vector.shape_cast %93 : vector<128x8xf32> to vector<1x8x16x8xf32>
    %c0_76 = arith.constant 0 : index
    %c0_77 = arith.constant 0 : index
    %c0_78 = arith.constant 0 : index
    %c0_79 = arith.constant 0 : index
    %95 = vector.load %arg9[%c0_76, %c0_77, %c0_78, %c0_79] : memref<1x8x16x8xf32, #tpu.memory_space<vmem>>, vector<1x8x16x8xf32>
    tpu.vector_store %arg9[%c0_76, %c0_77, %c0_78, %c0_79], %94 {strides = array<i32>} : memref<1x8x16x8xf32, #tpu.memory_space<vmem>>, vector<1x8x16x8xf32>,
    return
  }
  func.func @transform_0(%arg0: i32, %arg1: i32) -> (i32, i32, i32, i32) {
    %c0_i32 = arith.constant 0 : i32
    %c0_i32_0 = arith.constant 0 : i32
    %c0_i32_1 = arith.constant 0 : i32
    return %arg0, %arg1, %c0_i32, %c0_i32_0 : i32, i32, i32, i32
  }
  func.func @transform_1(%arg0: i32, %arg1: i32) -> (i32, i32, i32, i32) {
    %c8_i32 = arith.constant 8 : i32
    %0 = arith.muli %arg1, %c8_i32 : i32
    %c1_i32 = arith.constant 1 : i32
    %1 = arith.subi %0, %c1_i32 : i32
    %c0_i32 = arith.constant 0 : i32
    %2 = arith.maxsi %1, %c0_i32 : i32
    %c0_i32_0 = arith.constant 0 : i32
    %c0_i32_1 = arith.constant 0 : i32
    %c0_i32_2 = arith.constant 0 : i32
    return %arg0, %2, %c0_i32_0, %c0_i32_1 : i32, i32, i32, i32
  }
  func.func @transform_2(%arg0: i32, %arg1: i32) -> (i32, i32, i32, i32) {
    %c1_i32 = arith.constant 1 : i32
    %0 = arith.addi %arg1, %c1_i32 : i32
    %c8_i32 = arith.constant 8 : i32
    %1 = arith.muli %0, %c8_i32 : i32
    %c15_i32 = arith.constant 15 : i32
    %2 = arith.minsi %1, %c15_i32 : i32
    %c0_i32 = arith.constant 0 : i32
    %c0_i32_0 = arith.constant 0 : i32
    %c0_i32_1 = arith.constant 0 : i32
    return %arg0, %2, %c0_i32, %c0_i32_0 : i32, i32, i32, i32
  }
  func.func @transform_3(%arg0: i32, %arg1: i32) -> (i32, i32, i32) {
    %c0_i32 = arith.constant 0 : i32
    %c0_i32_0 = arith.constant 0 : i32
    %c0_i32_1 = arith.constant 0 : i32
    %c0_i32_2 = arith.constant 0 : i32
    return %c0_i32, %c0_i32_0, %c0_i32_1 : i32, i32, i32
  }
  func.func @transform_4(%arg0: i32, %arg1: i32) -> (i32, i32) {
    %c0_i32 = arith.constant 0 : i32
    %c0_i32_0 = arith.constant 0 : i32
    %c0_i32_1 = arith.constant 0 : i32
    return %c0_i32, %c0_i32_0 : i32, i32
  }
  func.func @transform_5(%arg0: i32, %arg1: i32) -> (i32, i32) {
    %c0_i32 = arith.constant 0 : i32
    %c0_i32_0 = arith.constant 0 : i32
    %c0_i32_1 = arith.constant 0 : i32
    return %c0_i32, %c0_i32_0 : i32, i32
  }
  func.func @transform_6(%arg0: i32, %arg1: i32) -> (i32, i32) {
    %c0_i32 = arith.constant 0 : i32
    %c0_i32_0 = arith.constant 0 : i32
    %c0_i32_1 = arith.constant 0 : i32
    return %c0_i32, %c0_i32_0 : i32, i32
  }
  func.func @transform_7(%arg0: i32, %arg1: i32) -> (i32, i32, i32, i32) {
    %c0_i32 = arith.constant 0 : i32
    %c0_i32_0 = arith.constant 0 : i32
    %c0_i32_1 = arith.constant 0 : i32
    return %arg0, %arg1, %c0_i32, %c0_i32_0 : i32, i32, i32, i32
  }
}

</mosaic_0001>

<llo_original>
// kernel: tpu_custom_call.1
$region0: #{tpu_custom_call.1}
  #allocation0 [shape = 'u32[]', space=smem, size = 0x4, offset = 0x4, fixed_abs, tag = 'smem constant byte address 0x4 - core index']
  #allocation1 [shape = 'u32[144,128]{1,0:T(1,128)}', space=vmem, size = 0x12000, scoped, tag = 'internal scratch']
  #allocation2 [shape = 'f32[1,10,18,4]{3,2,1,0:T(8,128)}', space=vmem, size = 0x1e000, scoped, tag = 'scratch operand']
  %s0 = inlined_call_operand.vmem [shape: f32[2,16,16,4], index: 0, kind: input, shape index: {}]
  %s1 = inlined_call_operand.vmem [shape: f32[2,16,16,4], index: 1, kind: input, shape index: {}]
  %s2 = inlined_call_operand.vmem [shape: f32[2,16,16,4], index: 2, kind: input, shape index: {}]
  %s3 = inlined_call_operand.vmem [shape: f32[3,3,4], index: 3, kind: input, shape index: {}]
  %s4 = inlined_call_operand.vmem [shape: f32[1,4], index: 4, kind: input, shape index: {}]
  %s5 = inlined_call_operand.vmem [shape: f32[4,8], index: 5, kind: input, shape index: {}]
  %s6 = inlined_call_operand.vmem [shape: f32[1,8], index: 6, kind: input, shape index: {}]
  %s7 = inlined_call_operand.vmem [shape: f32[2,16,16,8], index: 7, kind: output, shape index: {}]
  %s8 = sld [smem:[#allocation0]]
  $region61: #{tpu_custom_call.1} parent=0
    _
  %s10 = ssub.s32 1, %s8
  %s11 = scalar_select 0, %s10, %s8
  loop: start=0, step=1, limit=6
  $region2: #{tpu_custom_call.1} parent=0 // loop_pre_header
    _
  $region3: #{tpu_custom_call.1} parent=0 // loop_header
    %s13 = sphi 0, %s17
    %p14 = scmp.ge.s32.totalorder %s13, 6
    %s20 = sphi 0, %s32
    %s21 = sphi 0, %s28
    %s22 = sphi 0, %s20
    %s23 = sphi 0, %s21
    %s24 = sphi 0, %s22
    %s25 = sphi 0, %s23
    %s37 = sphi 0, %s39
    %s40 = sphi 0, %s37
    %s41 = sphi 0, %s40
    %s57 = sphi 0, %s41
    %s73 = sphi 0, %s75
    %s76 = sphi 0, %s73
    %s77 = sphi 0, %s76
    %s93 = sphi 0, %s77
    %s109 = sphi 0, %s111
    %s112 = sphi 0, %s109
    %s113 = sphi 0, %s112
    %s129 = sphi 0, %s113
    %s133 = sphi 0, %s133
    %s135 = sphi 0, %s133
    %s136 = sphi 0, %s135
    %s150 = sphi 0, %s136
    %s154 = sphi 0, %s154
    %s156 = sphi 0, %s154
    %s157 = sphi 0, %s156
    %s171 = sphi 0, %s157
    %s175 = sphi 0, %s175
    %s177 = sphi 0, %s175
    %s178 = sphi 0, %s177
    %s192 = sphi 0, %s178
    %s196 = sphi 0, %s196
    %s198 = sphi 0, %s196
    %s199 = sphi 0, %s198
    %s213 = sphi 0, %s199
    %s221 = sphi 0, %s223
    %s224 = sphi 0, %s221
    %s225 = sphi 0, %s224
    %s241 = sphi 0, %s225
  $region4: #{tpu_custom_call.1} parent=0 // loop_header_branch
    %16 = sbr.rel (%p14) target = $region8
  $region5: #{tpu_custom_call.1} parent=0 // loop_body
    %s18 = ssub.s32 %s13, 1
    %s19 = ssub.s32 %s13, 2
    %s26 = sadd.s32 1, %s21
    %p27 = scmp.ge.s32.totalorder %s26, 2
    %s28 = scalar_select %p27, 0, %s26
    %s29 = sadd.s32 1, %s20
    %s30 = scalar_select %p27, %s29, %s20
    %p31 = scmp.ge.s32.totalorder %s30, 2
    %s32 = scalar_select %p31, 0, %s30
    %s33 = ssub.s32 %s20, %s32
    %s34 = ssub.s32 %s21, %s28
    %s35 = sor.u32 %s33, %s34
    %p36 = scmp.eq.s32.totalorder %s35, 0
    %s38 = sadd.s32 %s37, 1
    %s39 = scalar_select %p36, %s37, %s38
    %p42 = pneg %p36
    %p43 = scmp.eq.s32.totalorder %s13, 3
    %p44 = por %p42, %p43
    %p45 = scmp.ne.s32.totalorder %s37, %s40
    %p46 = scmp.eq.s32.totalorder %s13, 0
    %p47 = por %p45, %p46
    %p48 = scmp.ne.s32.totalorder %s37, %s40
    %p49 = scmp.eq.s32.totalorder %s18, 3
    %p50 = por %p48, %p49
    %p51 = scmp.ne.s32.totalorder %s40, %s41
    %p52 = scmp.eq.s32.totalorder %s18, 0
    %p53 = por %p51, %p52
    %p54 = scmp.ne.s32.totalorder %s40, %s41
    %p55 = scmp.eq.s32.totalorder %s19, 3
    %p56 = por %p54, %p55
    %p58 = scmp.ne.s32.totalorder %s41, %s57
    %p59 = scmp.eq.s32.totalorder %s19, 0
    %p60 = por %p58, %p59
    %s61 = smul.u32 %s21, 8
    %s62 = ssub.s32 %s61, 1
    %p63 = scmp.gt.s32.totalorder %s62, 0
    %s64 = scalar_select %p63, %s62, 0
    %s65 = smul.u32 %s28, 8
    %s66 = ssub.s32 %s65, 1
    %p67 = scmp.gt.s32.totalorder %s66, 0
    %s68 = scalar_select %p67, %s66, 0
    %s69 = ssub.s32 %s20, %s32
    %s70 = ssub.s32 %s64, %s68
    %s71 = sor.u32 %s69, %s70
    %p72 = scmp.eq.s32.totalorder %s71, 0
    %s74 = sadd.s32 %s73, 1
    %s75 = scalar_select %p72, %s73, %s74
    %p78 = pneg %p72
    %p79 = scmp.eq.s32.totalorder %s13, 3
    %p80 = por %p78, %p79
    %p81 = scmp.ne.s32.totalorder %s73, %s76
    %p82 = scmp.eq.s32.totalorder %s13, 0
    %p83 = por %p81, %p82
    %p84 = scmp.ne.s32.totalorder %s73, %s76
    %p85 = scmp.eq.s32.totalorder %s18, 3
    %p86 = por %p84, %p85
    %p87 = scmp.ne.s32.totalorder %s76, %s77
    %p88 = scmp.eq.s32.totalorder %s18, 0
    %p89 = por %p87, %p88
    %p90 = scmp.ne.s32.totalorder %s76, %s77
    %p91 = scmp.eq.s32.totalorder %s19, 3
    %p92 = por %p90, %p91
    %p94 = scmp.ne.s32.totalorder %s77, %s93
    %p95 = scmp.eq.s32.totalorder %s19, 0
    %p96 = por %p94, %p95
    %s97 = sadd.s32 %s21, 1
    %s98 = smul.u32 %s97, 8
    %p99 = scmp.lt.s32.totalorder %s98, 15
    %s100 = scalar_select %p99, %s98, 15
    %s101 = sadd.s32 %s28, 1
    %s102 = smul.u32 %s101, 8
    %p103 = scmp.lt.s32.totalorder %s102, 15
    %s104 = scalar_select %p103, %s102, 15
    %s105 = ssub.s32 %s20, %s32
    %s106 = ssub.s32 %s100, %s104
    %s107 = sor.u32 %s105, %s106
    %p108 = scmp.eq.s32.totalorder %s107, 0
    %s110 = sadd.s32 %s109, 1
    %s111 = scalar_select %p108, %s109, %s110
    %p114 = pneg %p108
    %p115 = scmp.eq.s32.totalorder %s13, 3
    %p116 = por %p114, %p115
    %p117 = scmp.ne.s32.totalorder %s109, %s112
    %p118 = scmp.eq.s32.totalorder %s13, 0
    %p119 = por %p117, %p118
    %p120 = scmp.ne.s32.totalorder %s109, %s112
    %p121 = scmp.eq.s32.totalorder %s18, 3
    %p122 = por %p120, %p121
    %p123 = scmp.ne.s32.totalorder %s112, %s113
    %p124 = scmp.eq.s32.totalorder %s18, 0
    %p125 = por %p123, %p124
    %p126 = scmp.ne.s32.totalorder %s112, %s113
    %p127 = scmp.eq.s32.totalorder %s19, 3
    %p128 = por %p126, %p127
    %p130 = scmp.ne.s32.totalorder %s113, %s129
    %p131 = scmp.eq.s32.totalorder %s19, 0
    %p132 = por %p130, %p131
    %s134 = sadd.s32 %s133, 1
    %p137 = scmp.eq.s32.totalorder %s13, 3
    %p138 = scmp.ne.s32.totalorder %s133, %s135
    %p139 = scmp.eq.s32.totalorder %s13, 0
    %p140 = por %p138, %p139
    %p141 = scmp.ne.s32.totalorder %s133, %s135
    %p142 = scmp.eq.s32.totalorder %s18, 3
    %p143 = por %p141, %p142
    %p144 = scmp.ne.s32.totalorder %s135, %s136
    %p145 = scmp.eq.s32.totalorder %s18, 0
    %p146 = por %p144, %p145
    %p147 = scmp.ne.s32.totalorder %s135, %s136
    %p148 = scmp.eq.s32.totalorder %s19, 3
    %p149 = por %p147, %p148
    %p151 = scmp.ne.s32.totalorder %s136, %s150
    %p152 = scmp.eq.s32.totalorder %s19, 0
    %p153 = por %p151, %p152
    %s155 = sadd.s32 %s154, 1
    %p158 = scmp.eq.s32.totalorder %s13, 3
    %p159 = scmp.ne.s32.totalorder %s154, %s156
    %p160 = scmp.eq.s32.totalorder %s13, 0
    %p161 = por %p159, %p160
    %p162 = scmp.ne.s32.totalorder %s154, %s156
    %p163 = scmp.eq.s32.totalorder %s18, 3
    %p164 = por %p162, %p163
    %p165 = scmp.ne.s32.totalorder %s156, %s157
    %p166 = scmp.eq.s32.totalorder %s18, 0
    %p167 = por %p165, %p166
    %p168 = scmp.ne.s32.totalorder %s156, %s157
    %p169 = scmp.eq.s32.totalorder %s19, 3
    %p170 = por %p168, %p169
    %p172 = scmp.ne.s32.totalorder %s157, %s171
    %p173 = scmp.eq.s32.totalorder %s19, 0
    %p174 = por %p172, %p173
    %s176 = sadd.s32 %s175, 1
    %p179 = scmp.eq.s32.totalorder %s13, 3
    %p180 = scmp.ne.s32.totalorder %s175, %s177
    %p181 = scmp.eq.s32.totalorder %s13, 0
    %p182 = por %p180, %p181
    %p183 = scmp.ne.s32.totalorder %s175, %s177
    %p184 = scmp.eq.s32.totalorder %s18, 3
    %p185 = por %p183, %p184
    %p186 = scmp.ne.s32.totalorder %s177, %s178
    %p187 = scmp.eq.s32.totalorder %s18, 0
    %p188 = por %p186, %p187
    %p189 = scmp.ne.s32.totalorder %s177, %s178
    %p190 = scmp.eq.s32.totalorder %s19, 3
    %p191 = por %p189, %p190
    %p193 = scmp.ne.s32.totalorder %s178, %s192
    %p194 = scmp.eq.s32.totalorder %s19, 0
    %p195 = por %p193, %p194
    %s197 = sadd.s32 %s196, 1
    %p200 = scmp.eq.s32.totalorder %s13, 3
    %p201 = scmp.ne.s32.totalorder %s196, %s198
    %p202 = scmp.eq.s32.totalorder %s13, 0
    %p203 = por %p201, %p202
    %p204 = scmp.ne.s32.totalorder %s196, %s198
    %p205 = scmp.eq.s32.totalorder %s18, 3
    %p206 = por %p204, %p205
    %p207 = scmp.ne.s32.totalorder %s198, %s199
    %p208 = scmp.eq.s32.totalorder %s18, 0
    %p209 = por %p207, %p208
    %p210 = scmp.ne.s32.totalorder %s198, %s199
    %p211 = scmp.eq.s32.totalorder %s19, 3
    %p212 = por %p210, %p211
    %p214 = scmp.ne.s32.totalorder %s199, %s213
    %p215 = scmp.eq.s32.totalorder %s19, 0
    %p216 = por %p214, %p215
    %s217 = ssub.s32 %s20, %s32
    %s218 = ssub.s32 %s21, %s28
    %s219 = sor.u32 %s217, %s218
    %p220 = scmp.eq.s32.totalorder %s219, 0
    %s222 = sadd.s32 %s221, 1
    %s223 = scalar_select %p220, %s221, %s222
    %p226 = pneg %p220
    %p227 = scmp.eq.s32.totalorder %s13, 3
    %p228 = por %p226, %p227
    %p229 = scmp.ne.s32.totalorder %s221, %s224
    %p230 = scmp.eq.s32.totalorder %s13, 0
    %p231 = por %p229, %p230
    %p232 = scmp.ne.s32.totalorder %s221, %s224
    %p233 = scmp.eq.s32.totalorder %s18, 3
    %p234 = por %p232, %p233
    %p235 = scmp.ne.s32.totalorder %s224, %s225
    %p236 = scmp.eq.s32.totalorder %s18, 0
    %p237 = por %p235, %p236
    %p238 = scmp.ne.s32.totalorder %s224, %s225
    %p239 = scmp.eq.s32.totalorder %s19, 3
    %p240 = por %p238, %p239
    %p242 = scmp.ne.s32.totalorder %s225, %s241
    %p243 = scmp.eq.s32.totalorder %s19, 0
    %p244 = por %p242, %p243
    %p245 = scmp.le.s32.totalorder 1, %s13
    %p246 = scmp.lt.s32.totalorder %s13, 5
    %p247 = pnand %p245, %p246
    %p248 = pneg %p247
    // Predicated region
    $region9: #{tpu_custom_call.1} parent=5 // pred_check
      _
    $region10: #{tpu_custom_call.1} parent=5 // pred_check_branch
      %250 = sbr.rel (%p247) target = $region12
    $region11: #{tpu_custom_call.1} parent=5 // pred_region
      %s251 = ssub.s32 %s13, 1
      // Predicated region
      $region13: #{tpu_custom_call.1} parent=11 // pred_check
        %p252 = pneg %p146
      $region14: #{tpu_custom_call.1} parent=11 // pred_check_branch
        %254 = sbr.rel (%p252) target = $region16
      $region15: #{tpu_custom_call.1} parent=11 // pred_region
        _
      $region16: #{tpu_custom_call.1} parent=11 // pred_fallthru
        _
      // Predicated region
      $region17: #{tpu_custom_call.1} parent=11 // pred_check
        %p255 = pneg %p167
      $region18: #{tpu_custom_call.1} parent=11 // pred_check_branch
        %257 = sbr.rel (%p255) target = $region20
      $region19: #{tpu_custom_call.1} parent=11 // pred_region
        _
      $region20: #{tpu_custom_call.1} parent=11 // pred_fallthru
        _
      // Predicated region
      $region21: #{tpu_custom_call.1} parent=11 // pred_check
        %p258 = pneg %p188
      $region22: #{tpu_custom_call.1} parent=11 // pred_check_branch
        %260 = sbr.rel (%p258) target = $region24
      $region23: #{tpu_custom_call.1} parent=11 // pred_region
        _
      $region24: #{tpu_custom_call.1} parent=11 // pred_fallthru
        _
      // Predicated region
      $region25: #{tpu_custom_call.1} parent=11 // pred_check
        %p261 = pneg %p209
      $region26: #{tpu_custom_call.1} parent=11 // pred_check_branch
        %263 = sbr.rel (%p261) target = $region28
      $region27: #{tpu_custom_call.1} parent=11 // pred_region
        _
      $region28: #{tpu_custom_call.1} parent=11 // pred_fallthru
        _
    $region12: #{tpu_custom_call.1} parent=5 // pred_fallthru
      _
    %p264 = scmp.lt.s32.totalorder %s13, 4
    // Predicated region
    $region29: #{tpu_custom_call.1} parent=5 // pred_check
      %p265 = pneg %p264
    $region30: #{tpu_custom_call.1} parent=5 // pred_check_branch
      %267 = sbr.rel (%p265) target = $region32
    $region31: #{tpu_custom_call.1} parent=5 // pred_region
      // Predicated region
      $region33: #{tpu_custom_call.1} parent=31 // pred_check
        %p268 = pneg %p47
      $region34: #{tpu_custom_call.1} parent=31 // pred_check_branch
        %270 = sbr.rel (%p268) target = $region36
      $region35: #{tpu_custom_call.1} parent=31 // pred_region
        %s271 = smul.u32 8, %s21
        %p272 = scmp.lt.s32.totalorder %s20, 1
        %s273 = scalar_select %p272, %s20, 1
        %p274 = scmp.lt.s32.totalorder %s271, 15
        %s275 = scalar_select %p274, %s271, 15
        %s276 = smul.addr %s275, 2
        %s277 = smul.addr %s273, 32
        %s278 = sadd.s32 %s276, %s277
        %s279 = smul.addr %s278, 8
        %s280 = scalar_lea.vmem %s0, %s279
        %s281 = smul.u32 8, %s21
      $region36: #{tpu_custom_call.1} parent=31 // pred_fallthru
        _
      // Predicated region
      $region37: #{tpu_custom_call.1} parent=31 // pred_check
        %p282 = pneg %p83
      $region38: #{tpu_custom_call.1} parent=31 // pred_check_branch
        %284 = sbr.rel (%p282) target = $region40
      $region39: #{tpu_custom_call.1} parent=31 // pred_region
        %s285 = smul.u32 %s21, 8
        %s286 = ssub.s32 %s285, 1
        %p287 = scmp.gt.s32.totalorder %s286, 0
        %s288 = scalar_select %p287, %s286, 0
        %p289 = scmp.lt.s32.totalorder %s20, 1
        %s290 = scalar_select %p289, %s20, 1
        %p291 = scmp.lt.s32.totalorder %s288, 15
        %s292 = scalar_select %p291, %s288, 15
        %s293 = smul.addr %s292, 2
        %s294 = smul.addr %s290, 32
        %s295 = sadd.s32 %s293, %s294
        %s296 = smul.addr %s295, 8
        %s297 = scalar_lea.vmem %s1, %s296
        %s298 = smul.u32 %s21, 8
        %s299 = ssub.s32 %s298, 1
        %p300 = scmp.gt.s32.totalorder %s299, 0
        %s301 = scalar_select %p300, %s299, 0
      $region40: #{tpu_custom_call.1} parent=31 // pred_fallthru
        _
      // Predicated region
      $region41: #{tpu_custom_call.1} parent=31 // pred_check
        %p302 = pneg %p119
      $region42: #{tpu_custom_call.1} parent=31 // pred_check_branch
        %304 = sbr.rel (%p302) target = $region44
      $region43: #{tpu_custom_call.1} parent=31 // pred_region
        %s305 = sadd.s32 %s21, 1
        %s306 = smul.u32 %s305, 8
        %p307 = scmp.lt.s32.totalorder %s306, 15
        %s308 = scalar_select %p307, %s306, 15
        %p309 = scmp.lt.s32.totalorder %s20, 1
        %s310 = scalar_select %p309, %s20, 1
        %p311 = scmp.lt.s32.totalorder %s308, 15
        %s312 = scalar_select %p311, %s308, 15
        %s313 = smul.addr %s312, 2
        %s314 = smul.addr %s310, 32
        %s315 = sadd.s32 %s313, %s314
        %s316 = smul.addr %s315, 8
        %s317 = scalar_lea.vmem %s2, %s316
        %s318 = sadd.s32 %s21, 1
        %s319 = smul.u32 %s318, 8
        %p320 = scmp.lt.s32.totalorder %s319, 15
        %s321 = scalar_select %p320, %s319, 15
      $region44: #{tpu_custom_call.1} parent=31 // pred_fallthru
        _
    $region32: #{tpu_custom_call.1} parent=5 // pred_fallthru
      _
    %p322 = scmp.le.s32.totalorder 1, %s13
    %p323 = scmp.lt.s32.totalorder %s13, 5
    %p324 = pnand %p322, %p323
    %p325 = pneg %p324
    // Predicated region
    $region45: #{tpu_custom_call.1} parent=5 // pred_check
      _
    $region46: #{tpu_custom_call.1} parent=5 // pred_check_branch
      %327 = sbr.rel (%p324) target = $region48
    $region47: #{tpu_custom_call.1} parent=5 // pred_region
      %s328 = ssub.s32 %s13, 1
      %s329 = smul.u32 8, %s23
      %p330 = scmp.lt.s32.totalorder %s22, 1
      %s331 = scalar_select %p330, %s22, 1
      %p332 = scmp.lt.s32.totalorder %s329, 15
      %s333 = scalar_select %p332, %s329, 15
      %s334 = smul.addr %s333, 2
      %s335 = smul.addr %s331, 32
      %s336 = sadd.s32 %s334, %s335
      %s337 = smul.addr %s336, 8
      %s338 = scalar_lea.vmem %s0, %s337
      %p339 = pneg %p53
      %p340 = pneg %p50
      %s341 = smul.u32 %s23, 8
      %s342 = ssub.s32 %s341, 1
      %p343 = scmp.gt.s32.totalorder %s342, 0
      %s344 = scalar_select %p343, %s342, 0
      %p345 = scmp.lt.s32.totalorder %s22, 1
      %s346 = scalar_select %p345, %s22, 1
      %p347 = scmp.lt.s32.totalorder %s344, 15
      %s348 = scalar_select %p347, %s344, 15
      %s349 = smul.addr %s348, 2
      %s350 = smul.addr %s346, 32
      %s351 = sadd.s32 %s349, %s350
      %s352 = smul.addr %s351, 8
      %s353 = scalar_lea.vmem %s1, %s352
      %p354 = pneg %p89
      %p355 = pneg %p86
      %s356 = sadd.s32 %s23, 1
      %s357 = smul.u32 %s356, 8
      %p358 = scmp.lt.s32.totalorder %s357, 15
      %s359 = scalar_select %p358, %s357, 15
      %p360 = scmp.lt.s32.totalorder %s22, 1
      %s361 = scalar_select %p360, %s22, 1
      %p362 = scmp.lt.s32.totalorder %s359, 15
      %s363 = scalar_select %p362, %s359, 15
      %s364 = smul.addr %s363, 2
      %s365 = smul.addr %s361, 32
      %s366 = sadd.s32 %s364, %s365
      %s367 = smul.addr %s366, 8
      %s368 = scalar_lea.vmem %s2, %s367
      %p369 = pneg %p125
      %p370 = pneg %p122
      %p371 = pneg %p146
      %p372 = pneg %p143
      %p373 = pneg %p167
      %p374 = pneg %p164
      %p375 = pneg %p188
      %p376 = pneg %p185
      %p377 = pneg %p209
      %p378 = pneg %p206
      %p379 = pneg %p237
      %p380 = pneg %p234
      %s381 = smul.u32 8, %s23
      %p382 = scmp.lt.s32.totalorder %s22, 1
      %s383 = scalar_select %p382, %s22, 1
      %p384 = scmp.lt.s32.totalorder %s381, 15
      %s385 = scalar_select %p384, %s381, 15
      %s386 = smul.addr %s385, 2
      %s387 = smul.addr %s383, 32
      %s388 = sadd.s32 %s386, %s387
      %s389 = smul.addr %s388, 8
      %s390 = scalar_lea.vmem %s7, %s389
      %s391 = smul.u32 8, %s23
      %p392 = scmp.lt.s32.totalorder %s22, 1
      %s393 = scalar_select %p392, %s22, 1
      %p394 = scmp.lt.s32.totalorder %s391, 15
      %s395 = scalar_select %p394, %s391, 15
      %s396 = smul.addr %s395, 2
      %s397 = smul.addr %s393, 32
      %s398 = sadd.s32 %s396, %s397
      %s399 = smul.addr %s398, 8
      %s400 = scalar_lea.vmem %s0, %s399
      %s401 = smul.u32 8, %s23
      %s402 = smul.u32 %s23, 8
      %s403 = ssub.s32 %s402, 1
      %p404 = scmp.gt.s32.totalorder %s403, 0
      %s405 = scalar_select %p404, %s403, 0
      %p406 = scmp.lt.s32.totalorder %s22, 1
      %s407 = scalar_select %p406, %s22, 1
      %p408 = scmp.lt.s32.totalorder %s405, 15
      %s409 = scalar_select %p408, %s405, 15
      %s410 = smul.addr %s409, 2
      %s411 = smul.addr %s407, 32
      %s412 = sadd.s32 %s410, %s411
      %s413 = smul.addr %s412, 8
      %s414 = scalar_lea.vmem %s1, %s413
      %s415 = smul.u32 %s23, 8
      %s416 = ssub.s32 %s415, 1
      %p417 = scmp.gt.s32.totalorder %s416, 0
      %s418 = scalar_select %p417, %s416, 0
      %s419 = sadd.s32 %s23, 1
      %s420 = smul.u32 %s419, 8
      %p421 = scmp.lt.s32.totalorder %s420, 15
      %s422 = scalar_select %p421, %s420, 15
      %p423 = scmp.lt.s32.totalorder %s22, 1
      %s424 = scalar_select %p423, %s22, 1
      %p425 = scmp.lt.s32.totalorder %s422, 15
      %s426 = scalar_select %p425, %s422, 15
      %s427 = smul.addr %s426, 2
      %s428 = smul.addr %s424, 32
      %s429 = sadd.s32 %s427, %s428
      %s430 = smul.addr %s429, 8
      %s431 = scalar_lea.vmem %s2, %s430
      %s432 = sadd.s32 %s23, 1
      %s433 = smul.u32 %s432, 8
      %p434 = scmp.lt.s32.totalorder %s433, 15
      %s435 = scalar_select %p434, %s433, 15
      %s436 = smul.u32 8, %s23
      %p437 = scmp.lt.s32.totalorder %s22, 1
      %s438 = scalar_select %p437, %s22, 1
      %p439 = scmp.lt.s32.totalorder %s436, 15
      %s440 = scalar_select %p439, %s436, 15
      %s441 = smul.addr %s440, 2
      %s442 = smul.addr %s438, 32
      %s443 = sadd.s32 %s441, %s442
      %s444 = smul.addr %s443, 8
      %s445 = scalar_lea.vmem %s7, %s444
      %s446 = smul.u32 8, %s23
      %p447 = scmp.gt.s32.totalorder %s23, 0
      %v448 = vld [vmem:[%s400] sm:$0xff]
      %v449 = vld [vmem:[%s400 + $0x8] sm:$0xff]
      %v450 = vld [vmem:[%s400 + $0x10] sm:$0xff]
      %v451 = vld [vmem:[%s400 + $0x18] sm:$0xff]
      %v452 = vld [vmem:[%s400 + $0x20] sm:$0xff]
      %v453 = vld [vmem:[%s400 + $0x28] sm:$0xff]
      %v454 = vld [vmem:[%s400 + $0x30] sm:$0xff]
      %v455 = vld [vmem:[%s400 + $0x38] sm:$0xff]
      %v456 = vld [vmem:[%s400 + $0x40] sm:$0xff]
      %v457 = vld [vmem:[%s400 + $0x48] sm:$0xff]
      %v458 = vld [vmem:[%s400 + $0x50] sm:$0xff]
      %v459 = vld [vmem:[%s400 + $0x58] sm:$0xff]
      %v460 = vld [vmem:[%s400 + $0x60] sm:$0xff]
      %v461 = vld [vmem:[%s400 + $0x68] sm:$0xff]
      %v462 = vld [vmem:[%s400 + $0x70] sm:$0xff]
      %v463 = vld [vmem:[%s400 + $0x78] sm:$0xff]
      %s464 = scalar_lea.vmem [#allocation2], 24
      %vm465 = vcmask 31744
      %466 = vst.msk [vmem:[%s464 + $0x1] sm:$0xff] %vm465, %v448
      %467 = vst.msk [vmem:[%s464 + $0x9] sm:$0xff] %vm465, %v449
      %468 = vst.msk [vmem:[%s464 + $0x19] sm:$0xff] %vm465, %v450
      %469 = vst.msk [vmem:[%s464 + $0x21] sm:$0xff] %vm465, %v451
      %470 = vst.msk [vmem:[%s464 + $0x31] sm:$0xff] %vm465, %v452
      %471 = vst.msk [vmem:[%s464 + $0x39] sm:$0xff] %vm465, %v453
      %472 = vst.msk [vmem:[%s464 + $0x49] sm:$0xff] %vm465, %v454
      %473 = vst.msk [vmem:[%s464 + $0x51] sm:$0xff] %vm465, %v455
      %474 = vst.msk [vmem:[%s464 + $0x61] sm:$0xff] %vm465, %v456
      %475 = vst.msk [vmem:[%s464 + $0x69] sm:$0xff] %vm465, %v457
      %476 = vst.msk [vmem:[%s464 + $0x79] sm:$0xff] %vm465, %v458
      %477 = vst.msk [vmem:[%s464 + $0x81] sm:$0xff] %vm465, %v459
      %478 = vst.msk [vmem:[%s464 + $0x91] sm:$0xff] %vm465, %v460
      %479 = vst.msk [vmem:[%s464 + $0x99] sm:$0xff] %vm465, %v461
      %480 = vst.msk [vmem:[%s464 + $0xa9] sm:$0xff] %vm465, %v462
      %481 = vst.msk [vmem:[%s464 + $0xb1] sm:$0xff] %vm465, %v463
      %v482 = vld [vmem:[%s414] sm:$0xff]
      %v483 = vld [vmem:[%s414 + $0x8] sm:$0xff]
      %s484 = scalar_select %p447, 1, 0
      %v485 = vstv %s484
      %vm486 = vcmp.eq.s32.totalorder %v485, 1
      %v487 = vsel %vm486, %v482, 0.0
      %v488 = vsel %vm486, %v483, 0.0
      %489 = vst.msk [vmem:[#allocation2 + $0x1] sm:$0xff] %vm465, %v487
      %490 = vst.msk [vmem:[#allocation2 + $0x9] sm:$0xff] %vm465, %v488
      %p491 = scmp.lt.s32.totalorder %s23, 1
      %v492 = vld [vmem:[%s431] sm:$0xff]
      %v493 = vld [vmem:[%s431 + $0x8] sm:$0xff]
      %s494 = scalar_select %p491, 1, 0
      %v495 = vstv %s494
      %vm496 = vcmp.eq.s32.totalorder %v495, 1
      %v497 = vsel %vm496, %v492, 0.0
      %v498 = vsel %vm496, %v493, 0.0
      %s499 = scalar_lea.vmem [#allocation2], 216
      %500 = vst.msk [vmem:[%s499 + $0x1] sm:$0xff] %vm465, %v497
      %501 = vst.msk [vmem:[%s499 + $0x9] sm:$0xff] %vm465, %v498
      %vm502 = vcmask 24576
      %503 = vst.msk [vmem:[#allocation2] sm:$0x1] %vm502, 0.0
      %504 = vst.msk [vmem:[#allocation2 + $0x18] sm:$0x1] %vm502, 0.0
      %505 = vst.msk [vmem:[#allocation2 + $0x30] sm:$0x1] %vm502, 0.0
      %506 = vst.msk [vmem:[#allocation2 + $0x48] sm:$0x1] %vm502, 0.0
      %507 = vst.msk [vmem:[#allocation2 + $0x60] sm:$0x1] %vm502, 0.0
      %508 = vst.msk [vmem:[#allocation2 + $0x78] sm:$0x1] %vm502, 0.0
      %509 = vst.msk [vmem:[#allocation2 + $0x90] sm:$0x1] %vm502, 0.0
      %510 = vst.msk [vmem:[#allocation2 + $0xa8] sm:$0x1] %vm502, 0.0
      %511 = vst.msk [vmem:[#allocation2 + $0xc0] sm:$0x1] %vm502, 0.0
      %512 = vst.msk [vmem:[#allocation2 + $0xd8] sm:$0x1] %vm502, 0.0
      %513 = vst.msk [vmem:[#allocation2 + $0x11] sm:$0x1] %vm502, 0.0
      %514 = vst.msk [vmem:[#allocation2 + $0x29] sm:$0x1] %vm502, 0.0
      %515 = vst.msk [vmem:[#allocation2 + $0x41] sm:$0x1] %vm502, 0.0
      %516 = vst.msk [vmem:[#allocation2 + $0x59] sm:$0x1] %vm502, 0.0
      %517 = vst.msk [vmem:[#allocation2 + $0x71] sm:$0x1] %vm502, 0.0
      %518 = vst.msk [vmem:[#allocation2 + $0x89] sm:$0x1] %vm502, 0.0
      %519 = vst.msk [vmem:[#allocation2 + $0xa1] sm:$0x1] %vm502, 0.0
      %520 = vst.msk [vmem:[#allocation2 + $0xb9] sm:$0x1] %vm502, 0.0
      %521 = vst.msk [vmem:[#allocation2 + $0xd1] sm:$0x1] %vm502, 0.0
      %522 = vst.msk [vmem:[#allocation2 + $0xe9] sm:$0x1] %vm502, 0.0
      %v523 = vld [vmem:[%s3] sm:$0x7]
      %v524 = vld [vmem:[%s3 + $0x4] sm:$0x7]
      %v525 = vld [vmem:[%s3 + $0x8] sm:$0x7]
      %v526 = vld [vmem:[#allocation2] sm:$0xff]
      %v527 = vld [vmem:[#allocation2 + $0x8] sm:$0xff]
      %v528 = vld [vmem:[#allocation2 + $0x18] sm:$0xff]
      %v529 = vld [vmem:[#allocation2 + $0x20] sm:$0xff]
      %v530 = vld [vmem:[#allocation2 + $0x30] sm:$0xff]
      %v531 = vld [vmem:[#allocation2 + $0x38] sm:$0xff]
      %v532 = vld [vmem:[#allocation2 + $0x48] sm:$0xff]
      %v533 = vld [vmem:[#allocation2 + $0x50] sm:$0xff]
      %v534 = vld [vmem:[#allocation2 + $0x60] sm:$0xff]
      %v535 = vld [vmem:[#allocation2 + $0x68] sm:$0xff]
      %v536 = vld [vmem:[#allocation2 + $0x78] sm:$0xff]
      %v537 = vld [vmem:[#allocation2 + $0x80] sm:$0xff]
      %v538 = vld [vmem:[#allocation2 + $0x90] sm:$0xff]
      %v539 = vld [vmem:[#allocation2 + $0x98] sm:$0xff]
      %v540 = vld [vmem:[#allocation2 + $0xa8] sm:$0xff]
      %v541 = vld [vmem:[#allocation2 + $0xb0] sm:$0xff]
      %v542 = vlaneseq
      %v543 = vshrl.u32 %v542, 7
      %v544 = vsub.s32 0, %v543
      %v545 = vrot.slane %v523, %v544
      %v546 = vmul.f32 %v526, %v545
      %v547 = vmul.f32 %v527, %v545
      %v548 = vmul.f32 %v528, %v545
      %v549 = vmul.f32 %v529, %v545
      %v550 = vmul.f32 %v530, %v545
      %v551 = vmul.f32 %v531, %v545
      %v552 = vmul.f32 %v532, %v545
      %v553 = vmul.f32 %v533, %v545
      %v554 = vmul.f32 %v534, %v545
      %v555 = vmul.f32 %v535, %v545
      %v556 = vmul.f32 %v536, %v545
      %v557 = vmul.f32 %v537, %v545
      %v558 = vmul.f32 %v538, %v545
      %v559 = vmul.f32 %v539, %v545
      %v560 = vmul.f32 %v540, %v545
      %v561 = vmul.f32 %v541, %v545
      %v562 = vld [vmem:[#allocation2 + $0x1] sm:$0xff]
      %v563 = vld [vmem:[#allocation2 + $0x9] sm:$0xff]
      %v564 = vld [vmem:[#allocation2 + $0x19] sm:$0xff]
      %v565 = vld [vmem:[#allocation2 + $0x21] sm:$0xff]
      %v566 = vld [vmem:[#allocation2 + $0x31] sm:$0xff]
      %v567 = vld [vmem:[#allocation2 + $0x39] sm:$0xff]
      %v568 = vld [vmem:[#allocation2 + $0x49] sm:$0xff]
      %v569 = vld [vmem:[#allocation2 + $0x51] sm:$0xff]
      %v570 = vld [vmem:[#allocation2 + $0x61] sm:$0xff]
      %v571 = vld [vmem:[#allocation2 + $0x69] sm:$0xff]
      %v572 = vld [vmem:[#allocation2 + $0x79] sm:$0xff]
      %v573 = vld [vmem:[#allocation2 + $0x81] sm:$0xff]
      %v574 = vld [vmem:[#allocation2 + $0x91] sm:$0xff]
      %v575 = vld [vmem:[#allocation2 + $0x99] sm:$0xff]
      %v576 = vld [vmem:[#allocation2 + $0xa9] sm:$0xff]
      %v577 = vld [vmem:[#allocation2 + $0xb1] sm:$0xff]
      %v578 = vlaneseq
      %v579 = vshrl.u32 %v578, 7
      %v580 = vsub.s32 1, %v579
      %v581 = vrot.slane %v523, %v580
      %v582 = vmul.f32 %v562, %v581
      %v583 = vmul.f32 %v563, %v581
      %v584 = vmul.f32 %v564, %v581
      %v585 = vmul.f32 %v565, %v581
      %v586 = vmul.f32 %v566, %v581
      %v587 = vmul.f32 %v567, %v581
      %v588 = vmul.f32 %v568, %v581
      %v589 = vmul.f32 %v569, %v581
      %v590 = vmul.f32 %v570, %v581
      %v591 = vmul.f32 %v571, %v581
      %v592 = vmul.f32 %v572, %v581
      %v593 = vmul.f32 %v573, %v581
      %v594 = vmul.f32 %v574, %v581
      %v595 = vmul.f32 %v575, %v581
      %v596 = vmul.f32 %v576, %v581
      %v597 = vmul.f32 %v577, %v581
      %v598 = vadd.f32 %v546, %v582
      %v599 = vadd.f32 %v547, %v583
      %v600 = vadd.f32 %v548, %v584
      %v601 = vadd.f32 %v549, %v585
      %v602 = vadd.f32 %v550, %v586
      %v603 = vadd.f32 %v551, %v587
      %v604 = vadd.f32 %v552, %v588
      %v605 = vadd.f32 %v553, %v589
      %v606 = vadd.f32 %v554, %v590
      %v607 = vadd.f32 %v555, %v591
      %v608 = vadd.f32 %v556, %v592
      %v609 = vadd.f32 %v557, %v593
      %v610 = vadd.f32 %v558, %v594
      %v611 = vadd.f32 %v559, %v595
      %v612 = vadd.f32 %v560, %v596
      %v613 = vadd.f32 %v561, %v597
      %v614 = vld [vmem:[#allocation2 + $0x2] sm:$0xff]
      %v615 = vld [vmem:[#allocation2 + $0xa] sm:$0xff]
      %v616 = vld [vmem:[#allocation2 + $0x1a] sm:$0xff]
      %v617 = vld [vmem:[#allocation2 + $0x22] sm:$0xff]
      %v618 = vld [vmem:[#allocation2 + $0x32] sm:$0xff]
      %v619 = vld [vmem:[#allocation2 + $0x3a] sm:$0xff]
      %v620 = vld [vmem:[#allocation2 + $0x4a] sm:$0xff]
      %v621 = vld [vmem:[#allocation2 + $0x52] sm:$0xff]
      %v622 = vld [vmem:[#allocation2 + $0x62] sm:$0xff]
      %v623 = vld [vmem:[#allocation2 + $0x6a] sm:$0xff]
      %v624 = vld [vmem:[#allocation2 + $0x7a] sm:$0xff]
      %v625 = vld [vmem:[#allocation2 + $0x82] sm:$0xff]
      %v626 = vld [vmem:[#allocation2 + $0x92] sm:$0xff]
      %v627 = vld [vmem:[#allocation2 + $0x9a] sm:$0xff]
      %v628 = vld [vmem:[#allocation2 + $0xaa] sm:$0xff]
      %v629 = vld [vmem:[#allocation2 + $0xb2] sm:$0xff]
      %v630 = vlaneseq
      %v631 = vshrl.u32 %v630, 7
      %v632 = vsub.s32 2, %v631
      %v633 = vrot.slane %v523, %v632
      %v634 = vmul.f32 %v614, %v633
      %v635 = vmul.f32 %v615, %v633
      %v636 = vmul.f32 %v616, %v633
      %v637 = vmul.f32 %v617, %v633
      %v638 = vmul.f32 %v618, %v633
      %v639 = vmul.f32 %v619, %v633
      %v640 = vmul.f32 %v620, %v633
      %v641 = vmul.f32 %v621, %v633
      %v642 = vmul.f32 %v622, %v633
      %v643 = vmul.f32 %v623, %v633
      %v644 = vmul.f32 %v624, %v633
      %v645 = vmul.f32 %v625, %v633
      %v646 = vmul.f32 %v626, %v633
      %v647 = vmul.f32 %v627, %v633
      %v648 = vmul.f32 %v628, %v633
      %v649 = vmul.f32 %v629, %v633
      %v650 = vadd.f32 %v598, %v634
      %v651 = vadd.f32 %v599, %v635
      %v652 = vadd.f32 %v600, %v636
      %v653 = vadd.f32 %v601, %v637
      %v654 = vadd.f32 %v602, %v638
      %v655 = vadd.f32 %v603, %v639
      %v656 = vadd.f32 %v604, %v640
      %v657 = vadd.f32 %v605, %v641
      %v658 = vadd.f32 %v606, %v642
      %v659 = vadd.f32 %v607, %v643
      %v660 = vadd.f32 %v608, %v644
      %v661 = vadd.f32 %v609, %v645
      %v662 = vadd.f32 %v610, %v646
      %v663 = vadd.f32 %v611, %v647
      %v664 = vadd.f32 %v612, %v648
      %v665 = vadd.f32 %v613, %v649
      %v666 = vld [vmem:[%s464] sm:$0xff]
      %v667 = vld [vmem:[%s464 + $0x8] sm:$0xff]
      %v668 = vld [vmem:[%s464 + $0x18] sm:$0xff]
      %v669 = vld [vmem:[%s464 + $0x20] sm:$0xff]
      %v670 = vld [vmem:[%s464 + $0x30] sm:$0xff]
      %v671 = vld [vmem:[%s464 + $0x38] sm:$0xff]
      %v672 = vld [vmem:[%s464 + $0x48] sm:$0xff]
      %v673 = vld [vmem:[%s464 + $0x50] sm:$0xff]
      %v674 = vld [vmem:[%s464 + $0x60] sm:$0xff]
      %v675 = vld [vmem:[%s464 + $0x68] sm:$0xff]
      %v676 = vld [vmem:[%s464 + $0x78] sm:$0xff]
      %v677 = vld [vmem:[%s464 + $0x80] sm:$0xff]
      %v678 = vld [vmem:[%s464 + $0x90] sm:$0xff]
      %v679 = vld [vmem:[%s464 + $0x98] sm:$0xff]
      %v680 = vld [vmem:[%s464 + $0xa8] sm:$0xff]
      %v681 = vld [vmem:[%s464 + $0xb0] sm:$0xff]
      %v682 = vlaneseq
      %v683 = vshrl.u32 %v682, 7
      %v684 = vsub.s32 0, %v683
      %v685 = vrot.slane %v524, %v684
      %v686 = vmul.f32 %v666, %v685
      %v687 = vmul.f32 %v667, %v685
      %v688 = vmul.f32 %v668, %v685
      %v689 = vmul.f32 %v669, %v685
      %v690 = vmul.f32 %v670, %v685
      %v691 = vmul.f32 %v671, %v685
      %v692 = vmul.f32 %v672, %v685
      %v693 = vmul.f32 %v673, %v685
      %v694 = vmul.f32 %v674, %v685
      %v695 = vmul.f32 %v675, %v685
      %v696 = vmul.f32 %v676, %v685
      %v697 = vmul.f32 %v677, %v685
      %v698 = vmul.f32 %v678, %v685
      %v699 = vmul.f32 %v679, %v685
      %v700 = vmul.f32 %v680, %v685
      %v701 = vmul.f32 %v681, %v685
      %v702 = vadd.f32 %v650, %v686
      %v703 = vadd.f32 %v651, %v687
      %v704 = vadd.f32 %v652, %v688
      %v705 = vadd.f32 %v653, %v689
      %v706 = vadd.f32 %v654, %v690
      %v707 = vadd.f32 %v655, %v691
      %v708 = vadd.f32 %v656, %v692
      %v709 = vadd.f32 %v657, %v693
      %v710 = vadd.f32 %v658, %v694
      %v711 = vadd.f32 %v659, %v695
      %v712 = vadd.f32 %v660, %v696
      %v713 = vadd.f32 %v661, %v697
      %v714 = vadd.f32 %v662, %v698
      %v715 = vadd.f32 %v663, %v699
      %v716 = vadd.f32 %v664, %v700
      %v717 = vadd.f32 %v665, %v701
      %v718 = vld [vmem:[%s464 + $0x1] sm:$0xff]
      %v719 = vld [vmem:[%s464 + $0x9] sm:$0xff]
      %v720 = vld [vmem:[%s464 + $0x19] sm:$0xff]
      %v721 = vld [vmem:[%s464 + $0x21] sm:$0xff]
      %v722 = vld [vmem:[%s464 + $0x31] sm:$0xff]
      %v723 = vld [vmem:[%s464 + $0x39] sm:$0xff]
      %v724 = vld [vmem:[%s464 + $0x49] sm:$0xff]
      %v725 = vld [vmem:[%s464 + $0x51] sm:$0xff]
      %v726 = vld [vmem:[%s464 + $0x61] sm:$0xff]
      %v727 = vld [vmem:[%s464 + $0x69] sm:$0xff]
      %v728 = vld [vmem:[%s464 + $0x79] sm:$0xff]
      %v729 = vld [vmem:[%s464 + $0x81] sm:$0xff]
      %v730 = vld [vmem:[%s464 + $0x91] sm:$0xff]
      %v731 = vld [vmem:[%s464 + $0x99] sm:$0xff]
      %v732 = vld [vmem:[%s464 + $0xa9] sm:$0xff]
      %v733 = vld [vmem:[%s464 + $0xb1] sm:$0xff]
      %v734 = vlaneseq
      %v735 = vshrl.u32 %v734, 7
      %v736 = vsub.s32 1, %v735
      %v737 = vrot.slane %v524, %v736
      %v738 = vmul.f32 %v718, %v737
      %v739 = vmul.f32 %v719, %v737
      %v740 = vmul.f32 %v720, %v737
      %v741 = vmul.f32 %v721, %v737
      %v742 = vmul.f32 %v722, %v737
      %v743 = vmul.f32 %v723, %v737
      %v744 = vmul.f32 %v724, %v737
      %v745 = vmul.f32 %v725, %v737
      %v746 = vmul.f32 %v726, %v737
      %v747 = vmul.f32 %v727, %v737
      %v748 = vmul.f32 %v728, %v737
      %v749 = vmul.f32 %v729, %v737
      %v750 = vmul.f32 %v730, %v737
      %v751 = vmul.f32 %v731, %v737
      %v752 = vmul.f32 %v732, %v737
      %v753 = vmul.f32 %v733, %v737
      %v754 = vadd.f32 %v702, %v738
      %v755 = vadd.f32 %v703, %v739
      %v756 = vadd.f32 %v704, %v740
      %v757 = vadd.f32 %v705, %v741
      %v758 = vadd.f32 %v706, %v742
      %v759 = vadd.f32 %v707, %v743
      %v760 = vadd.f32 %v708, %v744
      %v761 = vadd.f32 %v709, %v745
      %v762 = vadd.f32 %v710, %v746
      %v763 = vadd.f32 %v711, %v747
      %v764 = vadd.f32 %v712, %v748
      %v765 = vadd.f32 %v713, %v749
      %v766 = vadd.f32 %v714, %v750
      %v767 = vadd.f32 %v715, %v751
      %v768 = vadd.f32 %v716, %v752
      %v769 = vadd.f32 %v717, %v753
      %v770 = vld [vmem:[%s464 + $0x2] sm:$0xff]
      %v771 = vld [vmem:[%s464 + $0xa] sm:$0xff]
      %v772 = vld [vmem:[%s464 + $0x1a] sm:$0xff]
      %v773 = vld [vmem:[%s464 + $0x22] sm:$0xff]
      %v774 = vld [vmem:[%s464 + $0x32] sm:$0xff]
      %v775 = vld [vmem:[%s464 + $0x3a] sm:$0xff]
      %v776 = vld [vmem:[%s464 + $0x4a] sm:$0xff]
      %v777 = vld [vmem:[%s464 + $0x52] sm:$0xff]
      %v778 = vld [vmem:[%s464 + $0x62] sm:$0xff]
      %v779 = vld [vmem:[%s464 + $0x6a] sm:$0xff]
      %v780 = vld [vmem:[%s464 + $0x7a] sm:$0xff]
      %v781 = vld [vmem:[%s464 + $0x82] sm:$0xff]
      %v782 = vld [vmem:[%s464 + $0x92] sm:$0xff]
      %v783 = vld [vmem:[%s464 + $0x9a] sm:$0xff]
      %v784 = vld [vmem:[%s464 + $0xaa] sm:$0xff]
      %v785 = vld [vmem:[%s464 + $0xb2] sm:$0xff]
      %v786 = vlaneseq
      %v787 = vshrl.u32 %v786, 7
      %v788 = vsub.s32 2, %v787
      %v789 = vrot.slane %v524, %v788
      %v790 = vmul.f32 %v770, %v789
      %v791 = vmul.f32 %v771, %v789
      %v792 = vmul.f32 %v772, %v789
      %v793 = vmul.f32 %v773, %v789
      %v794 = vmul.f32 %v774, %v789
      %v795 = vmul.f32 %v775, %v789
      %v796 = vmul.f32 %v776, %v789
      %v797 = vmul.f32 %v777, %v789
      %v798 = vmul.f32 %v778, %v789
      %v799 = vmul.f32 %v779, %v789
      %v800 = vmul.f32 %v780, %v789
      %v801 = vmul.f32 %v781, %v789
      %v802 = vmul.f32 %v782, %v789
      %v803 = vmul.f32 %v783, %v789
      %v804 = vmul.f32 %v784, %v789
      %v805 = vmul.f32 %v785, %v789
      %v806 = vadd.f32 %v754, %v790
      %v807 = vadd.f32 %v755, %v791
      %v808 = vadd.f32 %v756, %v792
      %v809 = vadd.f32 %v757, %v793
      %v810 = vadd.f32 %v758, %v794
      %v811 = vadd.f32 %v759, %v795
      %v812 = vadd.f32 %v760, %v796
      %v813 = vadd.f32 %v761, %v797
      %v814 = vadd.f32 %v762, %v798
      %v815 = vadd.f32 %v763, %v799
      %v816 = vadd.f32 %v764, %v800
      %v817 = vadd.f32 %v765, %v801
      %v818 = vadd.f32 %v766, %v802
      %v819 = vadd.f32 %v767, %v803
      %v820 = vadd.f32 %v768, %v804
      %v821 = vadd.f32 %v769, %v805
      %s822 = scalar_lea.vmem [#allocation2], 48
      %v823 = vld [vmem:[%s822] sm:$0xff]
      %v824 = vld [vmem:[%s822 + $0x8] sm:$0xff]
      %v825 = vld [vmem:[%s822 + $0x18] sm:$0xff]
      %v826 = vld [vmem:[%s822 + $0x20] sm:$0xff]
      %v827 = vld [vmem:[%s822 + $0x30] sm:$0xff]
      %v828 = vld [vmem:[%s822 + $0x38] sm:$0xff]
      %v829 = vld [vmem:[%s822 + $0x48] sm:$0xff]
      %v830 = vld [vmem:[%s822 + $0x50] sm:$0xff]
      %v831 = vld [vmem:[%s822 + $0x60] sm:$0xff]
      %v832 = vld [vmem:[%s822 + $0x68] sm:$0xff]
      %v833 = vld [vmem:[%s822 + $0x78] sm:$0xff]
      %v834 = vld [vmem:[%s822 + $0x80] sm:$0xff]
      %v835 = vld [vmem:[%s822 + $0x90] sm:$0xff]
      %v836 = vld [vmem:[%s822 + $0x98] sm:$0xff]
      %v837 = vld [vmem:[%s822 + $0xa8] sm:$0xff]
      %v838 = vld [vmem:[%s822 + $0xb0] sm:$0xff]
      %v839 = vlaneseq
      %v840 = vshrl.u32 %v839, 7
      %v841 = vsub.s32 0, %v840
      %v842 = vrot.slane %v525, %v841
      %v843 = vmul.f32 %v823, %v842
      %v844 = vmul.f32 %v824, %v842
      %v845 = vmul.f32 %v825, %v842
      %v846 = vmul.f32 %v826, %v842
      %v847 = vmul.f32 %v827, %v842
      %v848 = vmul.f32 %v828, %v842
      %v849 = vmul.f32 %v829, %v842
      %v850 = vmul.f32 %v830, %v842
      %v851 = vmul.f32 %v831, %v842
      %v852 = vmul.f32 %v832, %v842
      %v853 = vmul.f32 %v833, %v842
      %v854 = vmul.f32 %v834, %v842
      %v855 = vmul.f32 %v835, %v842
      %v856 = vmul.f32 %v836, %v842
      %v857 = vmul.f32 %v837, %v842
      %v858 = vmul.f32 %v838, %v842
      %v859 = vadd.f32 %v806, %v843
      %v860 = vadd.f32 %v807, %v844
      %v861 = vadd.f32 %v808, %v845
      %v862 = vadd.f32 %v809, %v846
      %v863 = vadd.f32 %v810, %v847
      %v864 = vadd.f32 %v811, %v848
      %v865 = vadd.f32 %v812, %v849
      %v866 = vadd.f32 %v813, %v850
      %v867 = vadd.f32 %v814, %v851
      %v868 = vadd.f32 %v815, %v852
      %v869 = vadd.f32 %v816, %v853
      %v870 = vadd.f32 %v817, %v854
      %v871 = vadd.f32 %v818, %v855
      %v872 = vadd.f32 %v819, %v856
      %v873 = vadd.f32 %v820, %v857
      %v874 = vadd.f32 %v821, %v858
      %v875 = vld [vmem:[%s822 + $0x1] sm:$0xff]
      %v876 = vld [vmem:[%s822 + $0x9] sm:$0xff]
      %v877 = vld [vmem:[%s822 + $0x19] sm:$0xff]
      %v878 = vld [vmem:[%s822 + $0x21] sm:$0xff]
      %v879 = vld [vmem:[%s822 + $0x31] sm:$0xff]
      %v880 = vld [vmem:[%s822 + $0x39] sm:$0xff]
      %v881 = vld [vmem:[%s822 + $0x49] sm:$0xff]
      %v882 = vld [vmem:[%s822 + $0x51] sm:$0xff]
      %v883 = vld [vmem:[%s822 + $0x61] sm:$0xff]
      %v884 = vld [vmem:[%s822 + $0x69] sm:$0xff]
      %v885 = vld [vmem:[%s822 + $0x79] sm:$0xff]
      %v886 = vld [vmem:[%s822 + $0x81] sm:$0xff]
      %v887 = vld [vmem:[%s822 + $0x91] sm:$0xff]
      %v888 = vld [vmem:[%s822 + $0x99] sm:$0xff]
      %v889 = vld [vmem:[%s822 + $0xa9] sm:$0xff]
      %v890 = vld [vmem:[%s822 + $0xb1] sm:$0xff]
      %v891 = vlaneseq
      %v892 = vshrl.u32 %v891, 7
      %v893 = vsub.s32 1, %v892
      %v894 = vrot.slane %v525, %v893
      %v895 = vmul.f32 %v875, %v894
      %v896 = vmul.f32 %v876, %v894
      %v897 = vmul.f32 %v877, %v894
      %v898 = vmul.f32 %v878, %v894
      %v899 = vmul.f32 %v879, %v894
      %v900 = vmul.f32 %v880, %v894
      %v901 = vmul.f32 %v881, %v894
      %v902 = vmul.f32 %v882, %v894
      %v903 = vmul.f32 %v883, %v894
      %v904 = vmul.f32 %v884, %v894
      %v905 = vmul.f32 %v885, %v894
      %v906 = vmul.f32 %v886, %v894
      %v907 = vmul.f32 %v887, %v894
      %v908 = vmul.f32 %v888, %v894
      %v909 = vmul.f32 %v889, %v894
      %v910 = vmul.f32 %v890, %v894
      %v911 = vadd.f32 %v859, %v895
      %v912 = vadd.f32 %v860, %v896
      %v913 = vadd.f32 %v861, %v897
      %v914 = vadd.f32 %v862, %v898
      %v915 = vadd.f32 %v863, %v899
      %v916 = vadd.f32 %v864, %v900
      %v917 = vadd.f32 %v865, %v901
      %v918 = vadd.f32 %v866, %v902
      %v919 = vadd.f32 %v867, %v903
      %v920 = vadd.f32 %v868, %v904
      %v921 = vadd.f32 %v869, %v905
      %v922 = vadd.f32 %v870, %v906
      %v923 = vadd.f32 %v871, %v907
      %v924 = vadd.f32 %v872, %v908
      %v925 = vadd.f32 %v873, %v909
      %v926 = vadd.f32 %v874, %v910
      %v927 = vld [vmem:[%s822 + $0x2] sm:$0xff]
      %v928 = vld [vmem:[%s822 + $0xa] sm:$0xff]
      %v929 = vld [vmem:[%s822 + $0x1a] sm:$0xff]
      %v930 = vld [vmem:[%s822 + $0x22] sm:$0xff]
      %v931 = vld [vmem:[%s822 + $0x32] sm:$0xff]
      %v932 = vld [vmem:[%s822 + $0x3a] sm:$0xff]
      %v933 = vld [vmem:[%s822 + $0x4a] sm:$0xff]
      %v934 = vld [vmem:[%s822 + $0x52] sm:$0xff]
      %v935 = vld [vmem:[%s822 + $0x62] sm:$0xff]
      %v936 = vld [vmem:[%s822 + $0x6a] sm:$0xff]
      %v937 = vld [vmem:[%s822 + $0x7a] sm:$0xff]
      %v938 = vld [vmem:[%s822 + $0x82] sm:$0xff]
      %v939 = vld [vmem:[%s822 + $0x92] sm:$0xff]
      %v940 = vld [vmem:[%s822 + $0x9a] sm:$0xff]
      %v941 = vld [vmem:[%s822 + $0xaa] sm:$0xff]
      %v942 = vld [vmem:[%s822 + $0xb2] sm:$0xff]
      %v943 = vlaneseq
      %v944 = vshrl.u32 %v943, 7
      %v945 = vsub.s32 2, %v944
      %v946 = vrot.slane %v525, %v945
      %v947 = vmul.f32 %v927, %v946
      %v948 = vmul.f32 %v928, %v946
      %v949 = vmul.f32 %v929, %v946
      %v950 = vmul.f32 %v930, %v946
      %v951 = vmul.f32 %v931, %v946
      %v952 = vmul.f32 %v932, %v946
      %v953 = vmul.f32 %v933, %v946
      %v954 = vmul.f32 %v934, %v946
      %v955 = vmul.f32 %v935, %v946
      %v956 = vmul.f32 %v936, %v946
      %v957 = vmul.f32 %v937, %v946
      %v958 = vmul.f32 %v938, %v946
      %v959 = vmul.f32 %v939, %v946
      %v960 = vmul.f32 %v940, %v946
      %v961 = vmul.f32 %v941, %v946
      %v962 = vmul.f32 %v942, %v946
      %v963 = vadd.f32 %v911, %v947
      %v964 = vadd.f32 %v912, %v948
      %v965 = vadd.f32 %v913, %v949
      %v966 = vadd.f32 %v914, %v950
      %v967 = vadd.f32 %v915, %v951
      %v968 = vadd.f32 %v916, %v952
      %v969 = vadd.f32 %v917, %v953
      %v970 = vadd.f32 %v918, %v954
      %v971 = vadd.f32 %v919, %v955
      %v972 = vadd.f32 %v920, %v956
      %v973 = vadd.f32 %v921, %v957
      %v974 = vadd.f32 %v922, %v958
      %v975 = vadd.f32 %v923, %v959
      %v976 = vadd.f32 %v924, %v960
      %v977 = vadd.f32 %v925, %v961
      %v978 = vadd.f32 %v926, %v962
      %v979 = vld [vmem:[%s4] sm:$0x1]
      %v981 = vlaneseq
      %v982 = vshrl.u32 %v981, 7
      %v983 = vsub.s32 0, %v982
      %v984 = vrot.slane %v979, %v983
      %v986 = vadd.f32 %v963, %v984
      %v987 = vadd.f32 %v964, %v984
      %v988 = vadd.f32 %v965, %v984
      %v989 = vadd.f32 %v966, %v984
      %v990 = vadd.f32 %v967, %v984
      %v991 = vadd.f32 %v968, %v984
      %v992 = vadd.f32 %v969, %v984
      %v993 = vadd.f32 %v970, %v984
      %v994 = vadd.f32 %v971, %v984
      %v995 = vadd.f32 %v972, %v984
      %v996 = vadd.f32 %v973, %v984
      %v997 = vadd.f32 %v974, %v984
      %v998 = vadd.f32 %v975, %v984
      %v999 = vadd.f32 %v976, %v984
      %v1000 = vadd.f32 %v977, %v984
      %v1001 = vadd.f32 %v978, %v984
      %v1002 = vmax.f32 %v986, 0.0
      %v1003 = vmax.f32 %v987, 0.0
      %v1004 = vmax.f32 %v988, 0.0
      %v1005 = vmax.f32 %v989, 0.0
      %v1006 = vmax.f32 %v990, 0.0
      %v1007 = vmax.f32 %v991, 0.0
      %v1008 = vmax.f32 %v992, 0.0
      %v1009 = vmax.f32 %v993, 0.0
      %v1010 = vmax.f32 %v994, 0.0
      %v1011 = vmax.f32 %v995, 0.0
      %v1012 = vmax.f32 %v996, 0.0
      %v1013 = vmax.f32 %v997, 0.0
      %v1014 = vmax.f32 %v998, 0.0
      %v1015 = vmax.f32 %v999, 0.0
      %v1016 = vmax.f32 %v1000, 0.0
      %v1017 = vmax.f32 %v1001, 0.0
      %v1018 = vld [vmem:[%s5] sm:$0xf]
      %v1019 = vld [vmem:[%s6] sm:$0x1]
      %v1021 = vlaneseq
      %v1022 = vshrl.u32 %v1021, 7
      %v1023 = vsub.s32 0, %v1022
      %v1024 = vrot.slane %v1019, %v1023
      %v1027 = vsel %vm465, %v1002, 0
      %v1030 = vsel %vm465, %v1003, 0
      %v1033 = vsel %vm465, %v1004, 0
      %v1036 = vsel %vm465, %v1005, 0
      %v1039 = vsel %vm465, %v1006, 0
      %v1042 = vsel %vm465, %v1007, 0
      %v1045 = vsel %vm465, %v1008, 0
      %v1048 = vsel %vm465, %v1009, 0
      %v1051 = vsel %vm465, %v1010, 0
      %v1054 = vsel %vm465, %v1011, 0
      %v1057 = vsel %vm465, %v1012, 0
      %v1060 = vsel %vm465, %v1013, 0
      %v1063 = vsel %vm465, %v1014, 0
      %v1066 = vsel %vm465, %v1015, 0
      %v1069 = vsel %vm465, %v1016, 0
      %v1072 = vsel %vm465, %v1017, 0
      %vm1074 = vcmask 1043456
      %v1076 = vsel %vm1074, %v1018, 0
      %1078 = vmatprep.subr.mxu0 0.0
      %1079 = vmatpush1.msra.mxu0 %v1076
      %1080 = vmatprep.subr.mxu0 0.0
      %1081 = vmatpush1.msra.mxu0 0.0
      %1082 = vmatprep.subr.mxu0 0.0
      %1083 = vmatpush1.msra.mxu0 0.0
      %1084 = vmatprep.subr.mxu0 0.0
      %1085 = vmatpush1.msra.mxu0 0.0
      %1086 = vmatprep.subr.mxu0 0.0
      %1087 = vmatpush1.msra.mxu0 0.0
      %1088 = vmatprep.subr.mxu0 0.0
      %1089 = vmatpush1.msra.mxu0 0.0
      %1090 = vmatprep.subr.mxu0 0.0
      %1091 = vmatpush1.msra.mxu0 0.0
      %1092 = vmatprep.subr.mxu0 0.0
      %1093 = vmatpush1.msra.mxu0 0.0
      %1094 = vmatprep.subr.mxu0 0.0
      %1095 = vmatpush1.msra.mxu0 0.0
      %1096 = vmatprep.subr.mxu0 0.0
      %1097 = vmatpush1.msra.mxu0 0.0
      %1098 = vmatprep.subr.mxu0 0.0
      %1099 = vmatpush1.msra.mxu0 0.0
      %1100 = vmatprep.subr.mxu0 0.0
      %1101 = vmatpush1.msra.mxu0 0.0
      %1102 = vmatprep.subr.mxu0 0.0
      %1103 = vmatpush1.msra.mxu0 0.0
      %1104 = vmatprep.subr.mxu0 0.0
      %1105 = vmatpush1.msra.mxu0 0.0
      %1106 = vmatprep.subr.mxu0 0.0
      %1107 = vmatpush1.msra.mxu0 0.0
      %1108 = vmatprep.subr.mxu0 0.0
      %1109 = vmatpush1.msra.mxu0 0.0
      %1110 = vmatprep.subr.mxu0 0.0
      %1111 = vmatpush1.msra.mxu0 0.0
      %1112 = vmatprep.subr.mxu0 0.0
      %1113 = vmatpush1.msra.mxu0 0.0
      %1114 = vmatprep.subr.mxu0 0.0
      %1115 = vmatpush1.msra.mxu0 0.0
      %1116 = vmatprep.subr.mxu0 0.0
      %1117 = vmatpush1.msra.mxu0 0.0
      %1118 = vmatprep.subr.mxu0 0.0
      %1119 = vmatpush1.msra.mxu0 0.0
      %1120 = vmatprep.subr.mxu0 0.0
      %1121 = vmatpush1.msra.mxu0 0.0
      %1122 = vmatprep.subr.mxu0 0.0
      %1123 = vmatpush1.msra.mxu0 0.0
      %1124 = vmatprep.subr.mxu0 0.0
      %1125 = vmatpush1.msra.mxu0 0.0
      %1126 = vmatprep.subr.mxu0 0.0
      %1127 = vmatpush1.msra.mxu0 0.0
      %1128 = vmatprep.subr.mxu0 0.0
      %1129 = vmatpush1.msra.mxu0 0.0
      %1130 = vmatprep.subr.mxu0 0.0
      %1131 = vmatpush1.msra.mxu0 0.0
      %1132 = vmatprep.subr.mxu0 0.0
      %1133 = vmatpush1.msra.mxu0 0.0
      %1134 = vmatprep.subr.mxu0 0.0
      %1135 = vmatpush1.msra.mxu0 0.0
      %1136 = vmatprep.subr.mxu0 0.0
      %1137 = vmatpush1.msra.mxu0 0.0
      %1138 = vmatprep.subr.mxu0 0.0
      %1139 = vmatpush1.msra.mxu0 0.0
      %1140 = vmatprep.subr.mxu0 0.0
      %1141 = vmatpush1.msra.mxu0 0.0
      %1142 = vmatprep.mubr.f32.mxu0 0.0
      %1143 = vmatmul.mubr.f32.gmra.mrb[0].mxu0 %v1027
      %v1144 = vpop.f32.mrb[0].mxu0
      %v1145 = vadd.f32 %v1024, %v1144
      %v1146 = vpop.f32.mrb[0].mxu0
      %1147 = vmatprep.mubr.f32.mxu0 0.0
      %1148 = vmatmul.mubr.f32.gmra.mrb[0].mxu0 %v1030
      %v1149 = vpop.f32.mrb[0].mxu0
      %v1150 = vadd.f32 %v1024, %v1149
      %v1151 = vpop.f32.mrb[0].mxu0
      %1152 = vmatprep.mubr.f32.mxu0 0.0
      %1153 = vmatmul.mubr.f32.gmra.mrb[0].mxu0 %v1033
      %v1154 = vpop.f32.mrb[0].mxu0
      %v1155 = vadd.f32 %v1024, %v1154
      %v1156 = vpop.f32.mrb[0].mxu0
      %1157 = vmatprep.mubr.f32.mxu0 0.0
      %1158 = vmatmul.mubr.f32.gmra.mrb[0].mxu0 %v1036
      %v1159 = vpop.f32.mrb[0].mxu0
      %v1160 = vadd.f32 %v1024, %v1159
      %v1161 = vpop.f32.mrb[0].mxu0
      %1162 = vmatprep.mubr.f32.mxu0 0.0
      %1163 = vmatmul.mubr.f32.gmra.mrb[0].mxu0 %v1039
      %v1164 = vpop.f32.mrb[0].mxu0
      %v1165 = vadd.f32 %v1024, %v1164
      %v1166 = vpop.f32.mrb[0].mxu0
      %1167 = vmatprep.mubr.f32.mxu0 0.0
      %1168 = vmatmul.mubr.f32.gmra.mrb[0].mxu0 %v1042
      %v1169 = vpop.f32.mrb[0].mxu0
      %v1170 = vadd.f32 %v1024, %v1169
      %v1171 = vpop.f32.mrb[0].mxu0
      %1172 = vmatprep.mubr.f32.mxu0 0.0
      %1173 = vmatmul.mubr.f32.gmra.mrb[0].mxu0 %v1045
      %v1174 = vpop.f32.mrb[0].mxu0
      %v1175 = vadd.f32 %v1024, %v1174
      %v1176 = vpop.f32.mrb[0].mxu0
      %1177 = vmatprep.mubr.f32.mxu0 0.0
      %1178 = vmatmul.mubr.f32.gmra.mrb[0].mxu0 %v1048
      %v1179 = vpop.f32.mrb[0].mxu0
      %v1180 = vadd.f32 %v1024, %v1179
      %v1181 = vpop.f32.mrb[0].mxu0
      %1182 = vmatprep.mubr.f32.mxu0 0.0
      %1183 = vmatmul.mubr.f32.gmra.mrb[0].mxu0 %v1051
      %v1184 = vpop.f32.mrb[0].mxu0
      %v1185 = vadd.f32 %v1024, %v1184
      %v1186 = vpop.f32.mrb[0].mxu0
      %1187 = vmatprep.mubr.f32.mxu0 0.0
      %1188 = vmatmul.mubr.f32.gmra.mrb[0].mxu0 %v1054
      %v1189 = vpop.f32.mrb[0].mxu0
      %v1190 = vadd.f32 %v1024, %v1189
      %v1191 = vpop.f32.mrb[0].mxu0
      %1192 = vmatprep.mubr.f32.mxu0 0.0
      %1193 = vmatmul.mubr.f32.gmra.mrb[0].mxu0 %v1057
      %v1194 = vpop.f32.mrb[0].mxu0
      %v1195 = vadd.f32 %v1024, %v1194
      %v1196 = vpop.f32.mrb[0].mxu0
      %1197 = vmatprep.mubr.f32.mxu0 0.0
      %1198 = vmatmul.mubr.f32.gmra.mrb[0].mxu0 %v1060
      %v1199 = vpop.f32.mrb[0].mxu0
      %v1200 = vadd.f32 %v1024, %v1199
      %v1201 = vpop.f32.mrb[0].mxu0
      %1202 = vmatprep.mubr.f32.mxu0 0.0
      %1203 = vmatmul.mubr.f32.gmra.mrb[0].mxu0 %v1063
      %v1204 = vpop.f32.mrb[0].mxu0
      %v1205 = vadd.f32 %v1024, %v1204
      %v1206 = vpop.f32.mrb[0].mxu0
      %1207 = vmatprep.mubr.f32.mxu0 0.0
      %1208 = vmatmul.mubr.f32.gmra.mrb[0].mxu0 %v1066
      %v1209 = vpop.f32.mrb[0].mxu0
      %v1210 = vadd.f32 %v1024, %v1209
      %v1211 = vpop.f32.mrb[0].mxu0
      %1212 = vmatprep.mubr.f32.mxu0 0.0
      %1213 = vmatmul.mubr.f32.gmra.mrb[0].mxu0 %v1069
      %v1214 = vpop.f32.mrb[0].mxu0
      %v1215 = vadd.f32 %v1024, %v1214
      %v1216 = vpop.f32.mrb[0].mxu0
      %1217 = vmatprep.mubr.f32.mxu0 0.0
      %1218 = vmatmul.mubr.f32.gmra.mrb[0].mxu0 %v1072
      %v1219 = vpop.f32.mrb[0].mxu0
      %v1220 = vadd.f32 %v1024, %v1219
      %v1221 = vpop.f32.mrb[0].mxu0
      %1222 = vdwg.mxu0
      %v1223 = vmax.f32 %v1145, 0.0
      %v1224 = vmax.f32 %v1150, 0.0
      %v1225 = vmax.f32 %v1155, 0.0
      %v1226 = vmax.f32 %v1160, 0.0
      %v1227 = vmax.f32 %v1165, 0.0
      %v1228 = vmax.f32 %v1170, 0.0
      %v1229 = vmax.f32 %v1175, 0.0
      %v1230 = vmax.f32 %v1180, 0.0
      %v1231 = vmax.f32 %v1185, 0.0
      %v1232 = vmax.f32 %v1190, 0.0
      %v1233 = vmax.f32 %v1195, 0.0
      %v1234 = vmax.f32 %v1200, 0.0
      %v1235 = vmax.f32 %v1205, 0.0
      %v1236 = vmax.f32 %v1210, 0.0
      %v1237 = vmax.f32 %v1215, 0.0
      %v1238 = vmax.f32 %v1220, 0.0
      %vm1239 = vcmask 64512
      %1240 = vst.msk [vmem:[%s445] sm:$0xff] %vm1239, %v1223
      %1241 = vst.msk [vmem:[%s445 + $0x8] sm:$0xff] %vm1239, %v1224
      %1242 = vst.msk [vmem:[%s445 + $0x10] sm:$0xff] %vm1239, %v1225
      %1243 = vst.msk [vmem:[%s445 + $0x18] sm:$0xff] %vm1239, %v1226
      %1244 = vst.msk [vmem:[%s445 + $0x20] sm:$0xff] %vm1239, %v1227
      %1245 = vst.msk [vmem:[%s445 + $0x28] sm:$0xff] %vm1239, %v1228
      %1246 = vst.msk [vmem:[%s445 + $0x30] sm:$0xff] %vm1239, %v1229
      %1247 = vst.msk [vmem:[%s445 + $0x38] sm:$0xff] %vm1239, %v1230
      %1248 = vst.msk [vmem:[%s445 + $0x40] sm:$0xff] %vm1239, %v1231
      %1249 = vst.msk [vmem:[%s445 + $0x48] sm:$0xff] %vm1239, %v1232
      %1250 = vst.msk [vmem:[%s445 + $0x50] sm:$0xff] %vm1239, %v1233
      %1251 = vst.msk [vmem:[%s445 + $0x58] sm:$0xff] %vm1239, %v1234
      %1252 = vst.msk [vmem:[%s445 + $0x60] sm:$0xff] %vm1239, %v1235
      %1253 = vst.msk [vmem:[%s445 + $0x68] sm:$0xff] %vm1239, %v1236
      %1254 = vst.msk [vmem:[%s445 + $0x70] sm:$0xff] %vm1239, %v1237
      %1255 = vst.msk [vmem:[%s445 + $0x78] sm:$0xff] %vm1239, %v1238
      %s1256 = smul.u32 8, %s23
      %p1257 = scmp.lt.s32.totalorder %s22, 1
      %s1258 = scalar_select %p1257, %s22, 1
      %p1259 = scmp.lt.s32.totalorder %s1256, 15
      %s1260 = scalar_select %p1259, %s1256, 15
      %s1261 = smul.addr %s1260, 2
      %s1262 = smul.addr %s1258, 32
      %s1263 = sadd.s32 %s1261, %s1262
      %s1264 = smul.addr %s1263, 8
      %s1265 = scalar_lea.vmem %s7, %s1264
      // Predicated region
      $region49: #{tpu_custom_call.1} parent=47 // pred_check
        %p1266 = pneg %p234
      $region50: #{tpu_custom_call.1} parent=47 // pred_check_branch
        %1268 = sbr.rel (%p1266) target = $region52
      $region51: #{tpu_custom_call.1} parent=47 // pred_region
        %s1269 = smul.u32 8, %s23
      $region52: #{tpu_custom_call.1} parent=47 // pred_fallthru
        _
    $region48: #{tpu_custom_call.1} parent=5 // pred_fallthru
      _
    %p1270 = scmp.le.s32.totalorder 2, %s13
    // Predicated region
    $region53: #{tpu_custom_call.1} parent=5 // pred_check
      %p1271 = pneg %p1270
    $region54: #{tpu_custom_call.1} parent=5 // pred_check_branch
      %1273 = sbr.rel (%p1271) target = $region56
    $region55: #{tpu_custom_call.1} parent=5 // pred_region
      %s1274 = ssub.s32 %s13, 2
      // Predicated region
      $region57: #{tpu_custom_call.1} parent=55 // pred_check
        %p1275 = pneg %p240
      $region58: #{tpu_custom_call.1} parent=55 // pred_check_branch
        %1277 = sbr.rel (%p1275) target = $region60
      $region59: #{tpu_custom_call.1} parent=55 // pred_region
        %s1278 = smul.u32 8, %s25
        %p1279 = scmp.lt.s32.totalorder %s24, 1
        %s1280 = scalar_select %p1279, %s24, 1
        %p1281 = scmp.lt.s32.totalorder %s1278, 15
        %s1282 = scalar_select %p1281, %s1278, 15
        %s1283 = smul.addr %s1282, 2
        %s1284 = smul.addr %s1280, 32
        %s1285 = sadd.s32 %s1283, %s1284
        %s1286 = smul.addr %s1285, 8
        %s1287 = scalar_lea.vmem %s7, %s1286
      $region60: #{tpu_custom_call.1} parent=55 // pred_fallthru
        _
    $region56: #{tpu_custom_call.1} parent=5 // pred_fallthru
      _
  $region6: #{tpu_custom_call.1} parent=0 // loop_footer
    %s17 = sadd.s32 1, %s13
  $region7: #{tpu_custom_call.1} parent=0 // loop_footer_branch
    %12 = sbr.rel target = $region3
  $region8: #{tpu_custom_call.1} parent=0 // loop_exit
    _

</llo_original>
